<compile_context>
chip_gen: v7x
topology: tpu7x:2x2x1
jax: 0.10.0
libtpu: 0.0.40
codegen_flags: <defaults>
</compile_context>

<pallas_src>
import functools
import math

import jax
import jax.numpy as jnp
from jax.experimental import pallas as pl
from jax.experimental.pallas import tpu as pltpu


# ----------------------------------------------------------------------------
# Fused ResidualAttentionBlock kernel (one batch element per grid step)
# ----------------------------------------------------------------------------
def _resblock_kernel(x_ref, mask_ref,
                     ln1_g_ref, ln1_b_ref,
                     wqkv_ref, bqkv_ref,
                     wo_ref, bo_ref,
                     ln2_g_ref, ln2_b_ref,
                     wfc_ref, bfc_ref, wproj_ref, bproj_ref,
                     o_ref, *, num_heads, eps, scale):
    f32 = jnp.float32
    x = x_ref[0].astype(f32)                      # (L, D)
    L, D = x.shape
    Dh = D // num_heads

    def layer_norm(v, g_ref, b_ref):
        mu = jnp.mean(v, axis=-1, keepdims=True)
        c = v - mu
        var = jnp.mean(c * c, axis=-1, keepdims=True)
        return c * jax.lax.rsqrt(var + eps) * g_ref[...] + b_ref[...]

    # ---- attention branch -------------------------------------------------
    h = layer_norm(x, ln1_g_ref, ln1_b_ref)       # (L, D)
    mask = mask_ref[...].astype(f32)              # (L, L), additive

    # Fused QKV projection: one lane-dense MXU matmul with full-D contraction.
    qkv = jnp.dot(h, wqkv_ref[...], preferred_element_type=f32) + bqkv_ref[...]

    heads_out = []
    for hh in range(num_heads):                   # static unroll over heads
        lo = hh * Dh
        qh = qkv[:, lo:lo + Dh] * scale                        # (L, Dh)
        kh = qkv[:, D + lo:D + lo + Dh]                        # (L, Dh)
        vh = qkv[:, 2 * D + lo:2 * D + lo + Dh]                # (L, Dh)
        logits = jnp.dot(qh, kh.T, preferred_element_type=f32) + mask
        m = jnp.max(logits, axis=-1, keepdims=True)
        p = jnp.exp(logits - m)
        p = p / jnp.sum(p, axis=-1, keepdims=True)
        heads_out.append(jnp.dot(p, vh, preferred_element_type=f32))  # (L, Dh)

    o = jnp.concatenate(heads_out, axis=-1)       # (L, D), head order preserved
    attn = jnp.dot(o, wo_ref[...], preferred_element_type=f32) + bo_ref[...]

    x = x + attn                                  # residual 1

    # ---- MLP branch (QuickGELU) --------------------------------------------
    h2 = layer_norm(x, ln2_g_ref, ln2_b_ref)
    f = jnp.dot(h2, wfc_ref[...], preferred_element_type=f32) + bfc_ref[...]
    f = f * jax.nn.sigmoid(1.702 * f)
    mlp = jnp.dot(f, wproj_ref[...], preferred_element_type=f32) + bproj_ref[...]

    o_ref[0] = (x + mlp).astype(o_ref.dtype)      # residual 2


def _resblock_forward(xb, mask, p, *, num_heads, eps):
    """xb: (N, L, D) batch-major activations; p: kernel-layout params."""
    N, L, D = xb.shape
    H = num_heads
    Dh = D // H
    kernel = functools.partial(
        _resblock_kernel, num_heads=H, eps=eps, scale=1.0 / math.sqrt(Dh))

    def const(shape):
        zeros = (0,) * len(shape)
        return pl.BlockSpec(shape, lambda n, _z=zeros: _z)

    in_specs = [
        pl.BlockSpec((1, L, D), lambda n: (n, 0, 0)),       # x
        const((L, L)),                                      # attn mask
        const((1, D)), const((1, D)),                       # ln1 gamma, beta
        const((D, 3 * D)), const((1, 3 * D)),               # fused Wqkv, bqkv
        const((D, D)), const((1, D)),                       # Wo, bo
        const((1, D)), const((1, D)),                       # ln2 gamma, beta
        const((D, 4 * D)), const((1, 4 * D)),               # c_fc W, b
        const((4 * D, D)), const((1, D)),                   # c_proj W, b
    ]

    # Advisory cost estimate (matmul-dominated, memory ~ activations+weights).
    flops = 2 * N * L * D * (12 * D + 2 * L)
    transcendentals = N * (H * L * L + L * 4 * D)
    weight_elems = (4 * D + 3 * D * D + 3 * D + D * D + D +
                    D * 4 * D + 4 * D + 4 * D * D + D + L * L)
    bytes_accessed = 4 * (2 * N * L * D + weight_elems)

    return pl.pallas_call(
        kernel,
        out_shape=jax.ShapeDtypeStruct((N, L, D), xb.dtype),
        grid_spec=pltpu.PrefetchScalarGridSpec(
            num_scalar_prefetch=0,
            grid=(N,),
            in_specs=in_specs,
            out_specs=pl.BlockSpec((1, L, D), lambda n: (n, 0, 0)),
        ),
        compiler_params=pltpu.CompilerParams(
            dimension_semantics=("parallel",)),
        cost_estimate=pl.CostEstimate(
            flops=flops, transcendentals=transcendentals,
            bytes_accessed=bytes_accessed),
    )(xb, mask,
      p["ln1_g"], p["ln1_b"],
      p["wqkv"], p["bqkv"],
      p["wo"], p["bo"],
      p["ln2_g"], p["ln2_b"],
      p["wfc"], p["bfc"], p["wproj"], p["bproj"])


def transformer_forward(x, layer_params, *, num_heads, attn_mask=None, eps=1e-5):
    """Transformer.forward(x).  x: (L, N, D) — seq-first, like the PyTorch module."""
    L, N, D = x.shape
    mask = (jnp.zeros((L, L), jnp.float32) if attn_mask is None
            else attn_mask.astype(jnp.float32))
    xb = jnp.transpose(x, (1, 0, 2))              # (N, L, D) batch-major for the grid
    for p in layer_params:
        xb = _resblock_forward(xb, mask, p, num_heads=num_heads, eps=eps)
    return jnp.transpose(xb, (1, 0, 2))


# ----------------------------------------------------------------------------
# Parameter handling: PyTorch-layout params -> kernel layout
# ----------------------------------------------------------------------------
def init_layer_params(key, D):
    """Deterministic parameters in PyTorch layout (row-major Linear weights)."""
    ks = jax.random.split(key, 12)
    s = 0.05
    return dict(
        ln1_g=1.0 + 0.1 * jax.random.normal(ks[0], (D,), jnp.float32),
        ln1_b=0.1 * jax.random.normal(ks[1], (D,), jnp.float32),
        in_proj_w=s * jax.random.normal(ks[2], (3 * D, D), jnp.float32),
        in_proj_b=s * jax.random.normal(ks[3], (3 * D,), jnp.float32),
        out_proj_w=s * jax.random.normal(ks[4], (D, D), jnp.float32),
        out_proj_b=s * jax.random.normal(ks[5], (D,), jnp.float32),
        ln2_g=1.0 + 0.1 * jax.random.normal(ks[6], (D,), jnp.float32),
        ln2_b=0.1 * jax.random.normal(ks[7], (D,), jnp.float32),
        c_fc_w=s * jax.random.normal(ks[8], (4 * D, D), jnp.float32),
        c_fc_b=0.1 * jax.random.normal(ks[9], (4 * D,), jnp.float32),
        c_proj_w=s * jax.random.normal(ks[10], (D, 4 * D), jnp.float32),
        c_proj_b=0.1 * jax.random.normal(ks[11], (D,), jnp.float32),
    )


def prepare_layer_params(p, num_heads):
    """Rearrange PyTorch-layout weights into the kernel's matmul layout."""
    D = p["ln1_g"].shape[0]
    # y = x @ W.T + b for every nn.Linear; the kernel does x @ W_k, so W_k = W.T.
    # in_proj rows [0:D] are Q, [D:2D] are K, [2D:3D] are V; transposing keeps
    # head ordering intact along the fused output (lane) axis.
    return dict(
        ln1_g=p["ln1_g"].reshape(1, D), ln1_b=p["ln1_b"].reshape(1, D),
        wqkv=p["in_proj_w"].T,                       # (D, 3D)
        bqkv=p["in_proj_b"].reshape(1, 3 * D),
        wo=p["out_proj_w"].T,                        # (D, D)
        bo=p["out_proj_b"].reshape(1, D),
        ln2_g=p["ln2_g"].reshape(1, D), ln2_b=p["ln2_b"].reshape(1, D),
        wfc=p["c_fc_w"].T, bfc=p["c_fc_b"].reshape(1, 4 * D),
        wproj=p["c_proj_w"].T, bproj=p["c_proj_b"].reshape(1, D),
    )


# ----------------------------------------------------------------------------
# Pure-JAX reference (mirrors the PyTorch module) for correctness check
# ----------------------------------------------------------------------------
def _layer_norm_ref(x, g, b, eps):
    mu = jnp.mean(x, axis=-1, keepdims=True)
    var = jnp.mean((x - mu) ** 2, axis=-1, keepdims=True)
    return (x - mu) / jnp.sqrt(var + eps) * g + b


def resblock_ref(x, p, num_heads, mask, eps=1e-5):
    L, N, D = x.shape
    H = num_heads
    Dh = D // H
    hp = jax.lax.Precision.HIGHEST
    h = _layer_norm_ref(x, p["ln1_g"], p["ln1_b"], eps)
    qkv = jnp.einsum("lnd,ed->lne", h, p["in_proj_w"], precision=hp) + p["in_proj_b"]
    q, k, v = jnp.split(qkv, 3, axis=-1)

    def split_heads(t):  # (L, N, D) -> (N, H, L, Dh)
        return t.reshape(L, N, H, Dh).transpose(1, 2, 0, 3)

    qh, kh, vh = split_heads(q), split_heads(k), split_heads(v)
    logits = jnp.einsum("nhqd,nhkd->nhqk", qh, kh, precision=hp) / math.sqrt(Dh) + mask
    w = jax.nn.softmax(logits, axis=-1)
    o = jnp.einsum("nhqk,nhkd->nhqd", w, vh, precision=hp)
    o = o.transpose(2, 0, 1, 3).reshape(L, N, D)
    o = jnp.einsum("lnd,ed->lne", o, p["out_proj_w"], precision=hp) + p["out_proj_b"]
    x = x + o
    h2 = _layer_norm_ref(x, p["ln2_g"], p["ln2_b"], eps)
    f = jnp.einsum("lnd,ed->lne", h2, p["c_fc_w"], precision=hp) + p["c_fc_b"]
    f = f * jax.nn.sigmoid(1.702 * f)
    m = jnp.einsum("lnd,ed->lne", f, p["c_proj_w"], precision=hp) + p["c_proj_b"]
    return x + m


def transformer_ref(x, torch_params, num_heads, attn_mask=None, eps=1e-5):
    L = x.shape[0]
    mask = (jnp.zeros((L, L), jnp.float32) if attn_mask is None
            else attn_mask.astype(jnp.float32))
    for p in torch_params:
        x = resblock_ref(x, p, num_heads, mask, eps)
    return x


# ----------------------------------------------------------------------------
if __name__ == "__main__":
    L, N, D, HEADS, LAYERS = 8, 2, 32, 4, 2   # seq=8, batch=2, width=32, 4 heads, 2 layers

    key = jax.random.PRNGKey(0)
    key, xk = jax.random.split(key)
    x = jax.random.normal(xk, (L, N, D), dtype=jnp.float32)   # (seq, batch, width)

    torch_params = []
    for _ in range(LAYERS):
        key, lk = jax.random.split(key)
        torch_params.append(init_layer_params(lk, D))
    kernel_params = [prepare_layer_params(p, HEADS) for p in torch_params]

    fwd = jax.jit(functools.partial(transformer_forward, num_heads=HEADS))
    y = jax.block_until_ready(fwd(x, kernel_params))

    y_ref = transformer_ref(x, torch_params, HEADS)

    assert y.shape == x.shape and y.dtype == x.dtype
    err = float(jnp.max(jnp.abs(y - y_ref)))
    assert err < 1e-2, f"max abs error too large: {err}"
    print("KERNEL_OK")
</pallas_src>

<mosaic_0001>
module attributes {stable_mosaic.version = 11 : i64} {
  func.func @_resblock_kernel(%arg0: i32, %arg1: memref<1x8x32xf32, #tpu.memory_space<vmem>>, %arg2: memref<8x8xf32, #tpu.memory_space<vmem>>, %arg3: memref<1x32xf32, #tpu.memory_space<vmem>>, %arg4: memref<1x32xf32, #tpu.memory_space<vmem>>, %arg5: memref<32x96xf32, #tpu.memory_space<vmem>>, %arg6: memref<1x96xf32, #tpu.memory_space<vmem>>, %arg7: memref<32x32xf32, #tpu.memory_space<vmem>>, %arg8: memref<1x32xf32, #tpu.memory_space<vmem>>, %arg9: memref<1x32xf32, #tpu.memory_space<vmem>>, %arg10: memref<1x32xf32, #tpu.memory_space<vmem>>, %arg11: memref<32x128xf32, #tpu.memory_space<vmem>>, %arg12: memref<1x128xf32, #tpu.memory_space<vmem>>, %arg13: memref<128x32xf32, #tpu.memory_space<vmem>>, %arg14: memref<1x32xf32, #tpu.memory_space<vmem>>, %arg15: memref<1x8x32xf32, #tpu.memory_space<vmem>>) attributes {dimension_semantics = [#tpu.dimension_semantics<parallel>], iteration_bounds = array<i64: 2>, scalar_prefetch = 0 : i64, scratch_operands = 0 : i64, tpu.core_type = #tpu.core_type<tc>, window_params = [{transform_indices = @transform_0, window_bounds = array<i64: 1, 8, 32>}, {pipeline_mode = #tpu.pipeline_mode<synchronous>, transform_indices = @transform_1, window_bounds = array<i64: 8, 8>}, {pipeline_mode = #tpu.pipeline_mode<synchronous>, transform_indices = @transform_2, window_bounds = array<i64: 1, 32>}, {pipeline_mode = #tpu.pipeline_mode<synchronous>, transform_indices = @transform_3, window_bounds = array<i64: 1, 32>}, {pipeline_mode = #tpu.pipeline_mode<synchronous>, transform_indices = @transform_4, window_bounds = array<i64: 32, 96>}, {pipeline_mode = #tpu.pipeline_mode<synchronous>, transform_indices = @transform_5, window_bounds = array<i64: 1, 96>}, {pipeline_mode = #tpu.pipeline_mode<synchronous>, transform_indices = @transform_6, window_bounds = array<i64: 32, 32>}, {pipeline_mode = #tpu.pipeline_mode<synchronous>, transform_indices = @transform_7, window_bounds = array<i64: 1, 32>}, {pipeline_mode = #tpu.pipeline_mode<synchronous>, transform_indices = @transform_8, window_bounds = array<i64: 1, 32>}, {pipeline_mode = #tpu.pipeline_mode<synchronous>, transform_indices = @transform_9, window_bounds = array<i64: 1, 32>}, {pipeline_mode = #tpu.pipeline_mode<synchronous>, transform_indices = @transform_10, window_bounds = array<i64: 32, 128>}, {pipeline_mode = #tpu.pipeline_mode<synchronous>, transform_indices = @transform_11, window_bounds = array<i64: 1, 128>}, {pipeline_mode = #tpu.pipeline_mode<synchronous>, transform_indices = @transform_12, window_bounds = array<i64: 128, 32>}, {pipeline_mode = #tpu.pipeline_mode<synchronous>, transform_indices = @transform_13, window_bounds = array<i64: 1, 32>}, {transform_indices = @transform_14, window_bounds = array<i64: 1, 8, 32>}]} {
    %c0 = arith.constant 0 : index
    %c0_0 = arith.constant 0 : index
    %c0_1 = arith.constant 0 : index
    %0 = vector.load %arg1[%c0, %c0_0, %c0_1] : memref<1x8x32xf32, #tpu.memory_space<vmem>>, vector<1x8x32xf32>
    %1 = vector.shape_cast %0 : vector<1x8x32xf32> to vector<8x32xf32>
    %cst = arith.constant dense<0.000000e+00> : vector<8xf32>
    %2 = vector.multi_reduction <add>, %1, %cst [1] : vector<8x32xf32> to vector<8xf32>
    %3 = vector.shape_cast %2 : vector<8xf32> to vector<8x1xf32>
    %cst_2 = arith.constant 3.200000e+01 : f32
    %4 = vector.broadcast %cst_2 : f32 to vector<8x1xf32>
    %5 = arith.divf %3, %4 : vector<8x1xf32>
    %6 = vector.broadcast %5 : vector<8x1xf32> to vector<8x32xf32>
    %7 = arith.subf %1, %6 : vector<8x32xf32>
    %8 = arith.mulf %7, %7 : vector<8x32xf32>
    %cst_3 = arith.constant dense<0.000000e+00> : vector<8xf32>
    %9 = vector.multi_reduction <add>, %8, %cst_3 [1] : vector<8x32xf32> to vector<8xf32>
    %10 = vector.shape_cast %9 : vector<8xf32> to vector<8x1xf32>
    %cst_4 = arith.constant 3.200000e+01 : f32
    %11 = vector.broadcast %cst_4 : f32 to vector<8x1xf32>
    %12 = arith.divf %10, %11 : vector<8x1xf32>
    %cst_5 = arith.constant 9.99999974E-6 : f32
    %13 = vector.broadcast %cst_5 : f32 to vector<8x1xf32>
    %14 = arith.addf %12, %13 : vector<8x1xf32>
    %15 = math.rsqrt %14 : vector<8x1xf32>
    %16 = vector.broadcast %15 : vector<8x1xf32> to vector<8x32xf32>
    %17 = arith.mulf %7, %16 : vector<8x32xf32>
    %c0_6 = arith.constant 0 : index
    %c0_7 = arith.constant 0 : index
    %18 = vector.load %arg3[%c0_6, %c0_7] : memref<1x32xf32, #tpu.memory_space<vmem>>, vector<1x32xf32>
    %19 = vector.broadcast %18 : vector<1x32xf32> to vector<8x32xf32>
    %20 = arith.mulf %17, %19 : vector<8x32xf32>
    %c0_8 = arith.constant 0 : index
    %c0_9 = arith.constant 0 : index
    %21 = vector.load %arg4[%c0_8, %c0_9] : memref<1x32xf32, #tpu.memory_space<vmem>>, vector<1x32xf32>
    %22 = vector.broadcast %21 : vector<1x32xf32> to vector<8x32xf32>
    %23 = arith.addf %20, %22 : vector<8x32xf32>
    %c0_10 = arith.constant 0 : index
    %c0_11 = arith.constant 0 : index
    %24 = vector.load %arg2[%c0_10, %c0_11] : memref<8x8xf32, #tpu.memory_space<vmem>>, vector<8x8xf32>
    %c0_12 = arith.constant 0 : index
    %c0_13 = arith.constant 0 : index
    %25 = vector.load %arg5[%c0_12, %c0_13] : memref<32x96xf32, #tpu.memory_space<vmem>>, vector<32x96xf32>
    %cst_14 = arith.constant dense<0.000000e+00> : vector<8x96xf32>
    %26 = tpu.matmul %23, %25, %cst_14 {dimension_numbers = #tpu.dot_dimension_numbers<[1], [0], [0], [1], [0, 0, 1, 1], [], []>} : vector<8x32xf32>, vector<32x96xf32>, vector<8x96xf32> -> vector<8x96xf32>
    %c0_15 = arith.constant 0 : index
    %c0_16 = arith.constant 0 : index
    %27 = vector.load %arg6[%c0_15, %c0_16] : memref<1x96xf32, #tpu.memory_space<vmem>>, vector<1x96xf32>
    %28 = vector.broadcast %27 : vector<1x96xf32> to vector<8x96xf32>
    %29 = arith.addf %26, %28 : vector<8x96xf32>
    %30 = vector.extract_strided_slice %29 {offsets = [0, 0], sizes = [8, 8], strides = [1, 1]} : vector<8x96xf32> to vector<8x8xf32>
    %cst_17 = arith.constant 0.353553385 : f32
    %31 = vector.broadcast %cst_17 : f32 to vector<8x8xf32>
    %32 = arith.mulf %30, %31 : vector<8x8xf32>
    %33 = vector.extract_strided_slice %29 {offsets = [0, 32], sizes = [8, 8], strides = [1, 1]} : vector<8x96xf32> to vector<8x8xf32>
    %34 = vector.extract_strided_slice %29 {offsets = [0, 64], sizes = [8, 8], strides = [1, 1]} : vector<8x96xf32> to vector<8x8xf32>
    %35 = tpu.transpose %33, [1, 0] : vector<8x8xf32> -> vector<8x8xf32>
    %cst_18 = arith.constant dense<0.000000e+00> : vector<8x8xf32>
    %36 = tpu.matmul %32, %35, %cst_18 {dimension_numbers = #tpu.dot_dimension_numbers<[1], [0], [0], [1], [0, 0, 1, 1], [], []>} : vector<8x8xf32>, vector<8x8xf32>, vector<8x8xf32> -> vector<8x8xf32>
    %37 = arith.addf %36, %24 : vector<8x8xf32>
    %cst_19 = arith.constant dense<0xFF800000> : vector<8xf32>
    %38 = vector.multi_reduction <maximumf>, %37, %cst_19 [1] : vector<8x8xf32> to vector<8xf32>
    %39 = vector.shape_cast %38 : vector<8xf32> to vector<8x1xf32>
    %40 = vector.broadcast %39 : vector<8x1xf32> to vector<8x8xf32>
    %41 = arith.subf %37, %40 : vector<8x8xf32>
    %42 = math.exp %41 : vector<8x8xf32>
    %cst_20 = arith.constant dense<0.000000e+00> : vector<8xf32>
    %43 = vector.multi_reduction <add>, %42, %cst_20 [1] : vector<8x8xf32> to vector<8xf32>
    %44 = vector.shape_cast %43 : vector<8xf32> to vector<8x1xf32>
    %45 = vector.broadcast %44 : vector<8x1xf32> to vector<8x8xf32>
    %46 = arith.divf %42, %45 : vector<8x8xf32>
    %cst_21 = arith.constant dense<0.000000e+00> : vector<8x8xf32>
    %47 = tpu.matmul %46, %34, %cst_21 {dimension_numbers = #tpu.dot_dimension_numbers<[1], [0], [0], [1], [0, 0, 1, 1], [], []>} : vector<8x8xf32>, vector<8x8xf32>, vector<8x8xf32> -> vector<8x8xf32>
    %48 = vector.extract_strided_slice %29 {offsets = [0, 8], sizes = [8, 8], strides = [1, 1]} : vector<8x96xf32> to vector<8x8xf32>
    %cst_22 = arith.constant 0.353553385 : f32
    %49 = vector.broadcast %cst_22 : f32 to vector<8x8xf32>
    %50 = arith.mulf %48, %49 : vector<8x8xf32>
    %51 = vector.extract_strided_slice %29 {offsets = [0, 40], sizes = [8, 8], strides = [1, 1]} : vector<8x96xf32> to vector<8x8xf32>
    %52 = vector.extract_strided_slice %29 {offsets = [0, 72], sizes = [8, 8], strides = [1, 1]} : vector<8x96xf32> to vector<8x8xf32>
    %53 = tpu.transpose %51, [1, 0] : vector<8x8xf32> -> vector<8x8xf32>
    %cst_23 = arith.constant dense<0.000000e+00> : vector<8x8xf32>
    %54 = tpu.matmul %50, %53, %cst_23 {dimension_numbers = #tpu.dot_dimension_numbers<[1], [0], [0], [1], [0, 0, 1, 1], [], []>} : vector<8x8xf32>, vector<8x8xf32>, vector<8x8xf32> -> vector<8x8xf32>
    %55 = arith.addf %54, %24 : vector<8x8xf32>
    %cst_24 = arith.constant dense<0xFF800000> : vector<8xf32>
    %56 = vector.multi_reduction <maximumf>, %55, %cst_24 [1] : vector<8x8xf32> to vector<8xf32>
    %57 = vector.shape_cast %56 : vector<8xf32> to vector<8x1xf32>
    %58 = vector.broadcast %57 : vector<8x1xf32> to vector<8x8xf32>
    %59 = arith.subf %55, %58 : vector<8x8xf32>
    %60 = math.exp %59 : vector<8x8xf32>
    %cst_25 = arith.constant dense<0.000000e+00> : vector<8xf32>
    %61 = vector.multi_reduction <add>, %60, %cst_25 [1] : vector<8x8xf32> to vector<8xf32>
    %62 = vector.shape_cast %61 : vector<8xf32> to vector<8x1xf32>
    %63 = vector.broadcast %62 : vector<8x1xf32> to vector<8x8xf32>
    %64 = arith.divf %60, %63 : vector<8x8xf32>
    %cst_26 = arith.constant dense<0.000000e+00> : vector<8x8xf32>
    %65 = tpu.matmul %64, %52, %cst_26 {dimension_numbers = #tpu.dot_dimension_numbers<[1], [0], [0], [1], [0, 0, 1, 1], [], []>} : vector<8x8xf32>, vector<8x8xf32>, vector<8x8xf32> -> vector<8x8xf32>
    %66 = vector.extract_strided_slice %29 {offsets = [0, 16], sizes = [8, 8], strides = [1, 1]} : vector<8x96xf32> to vector<8x8xf32>
    %cst_27 = arith.constant 0.353553385 : f32
    %67 = vector.broadcast %cst_27 : f32 to vector<8x8xf32>
    %68 = arith.mulf %66, %67 : vector<8x8xf32>
    %69 = vector.extract_strided_slice %29 {offsets = [0, 48], sizes = [8, 8], strides = [1, 1]} : vector<8x96xf32> to vector<8x8xf32>
    %70 = vector.extract_strided_slice %29 {offsets = [0, 80], sizes = [8, 8], strides = [1, 1]} : vector<8x96xf32> to vector<8x8xf32>
    %71 = tpu.transpose %69, [1, 0] : vector<8x8xf32> -> vector<8x8xf32>
    %cst_28 = arith.constant dense<0.000000e+00> : vector<8x8xf32>
    %72 = tpu.matmul %68, %71, %cst_28 {dimension_numbers = #tpu.dot_dimension_numbers<[1], [0], [0], [1], [0, 0, 1, 1], [], []>} : vector<8x8xf32>, vector<8x8xf32>, vector<8x8xf32> -> vector<8x8xf32>
    %73 = arith.addf %72, %24 : vector<8x8xf32>
    %cst_29 = arith.constant dense<0xFF800000> : vector<8xf32>
    %74 = vector.multi_reduction <maximumf>, %73, %cst_29 [1] : vector<8x8xf32> to vector<8xf32>
    %75 = vector.shape_cast %74 : vector<8xf32> to vector<8x1xf32>
    %76 = vector.broadcast %75 : vector<8x1xf32> to vector<8x8xf32>
    %77 = arith.subf %73, %76 : vector<8x8xf32>
    %78 = math.exp %77 : vector<8x8xf32>
    %cst_30 = arith.constant dense<0.000000e+00> : vector<8xf32>
    %79 = vector.multi_reduction <add>, %78, %cst_30 [1] : vector<8x8xf32> to vector<8xf32>
    %80 = vector.shape_cast %79 : vector<8xf32> to vector<8x1xf32>
    %81 = vector.broadcast %80 : vector<8x1xf32> to vector<8x8xf32>
    %82 = arith.divf %78, %81 : vector<8x8xf32>
    %cst_31 = arith.constant dense<0.000000e+00> : vector<8x8xf32>
    %83 = tpu.matmul %82, %70, %cst_31 {dimension_numbers = #tpu.dot_dimension_numbers<[1], [0], [0], [1], [0, 0, 1, 1], [], []>} : vector<8x8xf32>, vector<8x8xf32>, vector<8x8xf32> -> vector<8x8xf32>
    %84 = vector.extract_strided_slice %29 {offsets = [0, 24], sizes = [8, 8], strides = [1, 1]} : vector<8x96xf32> to vector<8x8xf32>
    %cst_32 = arith.constant 0.353553385 : f32
    %85 = vector.broadcast %cst_32 : f32 to vector<8x8xf32>
    %86 = arith.mulf %84, %85 : vector<8x8xf32>
    %87 = vector.extract_strided_slice %29 {offsets = [0, 56], sizes = [8, 8], strides = [1, 1]} : vector<8x96xf32> to vector<8x8xf32>
    %88 = vector.extract_strided_slice %29 {offsets = [0, 88], sizes = [8, 8], strides = [1, 1]} : vector<8x96xf32> to vector<8x8xf32>
    %89 = tpu.transpose %87, [1, 0] : vector<8x8xf32> -> vector<8x8xf32>
    %cst_33 = arith.constant dense<0.000000e+00> : vector<8x8xf32>
    %90 = tpu.matmul %86, %89, %cst_33 {dimension_numbers = #tpu.dot_dimension_numbers<[1], [0], [0], [1], [0, 0, 1, 1], [], []>} : vector<8x8xf32>, vector<8x8xf32>, vector<8x8xf32> -> vector<8x8xf32>
    %91 = arith.addf %90, %24 : vector<8x8xf32>
    %cst_34 = arith.constant dense<0xFF800000> : vector<8xf32>
    %92 = vector.multi_reduction <maximumf>, %91, %cst_34 [1] : vector<8x8xf32> to vector<8xf32>
    %93 = vector.shape_cast %92 : vector<8xf32> to vector<8x1xf32>
    %94 = vector.broadcast %93 : vector<8x1xf32> to vector<8x8xf32>
    %95 = arith.subf %91, %94 : vector<8x8xf32>
    %96 = math.exp %95 : vector<8x8xf32>
    %cst_35 = arith.constant dense<0.000000e+00> : vector<8xf32>
    %97 = vector.multi_reduction <add>, %96, %cst_35 [1] : vector<8x8xf32> to vector<8xf32>
    %98 = vector.shape_cast %97 : vector<8xf32> to vector<8x1xf32>
    %99 = vector.broadcast %98 : vector<8x1xf32> to vector<8x8xf32>
    %100 = arith.divf %96, %99 : vector<8x8xf32>
    %cst_36 = arith.constant dense<0.000000e+00> : vector<8x8xf32>
    %101 = tpu.matmul %100, %88, %cst_36 {dimension_numbers = #tpu.dot_dimension_numbers<[1], [0], [0], [1], [0, 0, 1, 1], [], []>} : vector<8x8xf32>, vector<8x8xf32>, vector<8x8xf32> -> vector<8x8xf32>
    %102 = tpu.concatenate %47, %65, %83, %101 in 1 : vector<8x8xf32>, vector<8x8xf32>, vector<8x8xf32>, vector<8x8xf32> -> vector<8x32xf32>
    %c0_37 = arith.constant 0 : index
    %c0_38 = arith.constant 0 : index
    %103 = vector.load %arg7[%c0_37, %c0_38] : memref<32x32xf32, #tpu.memory_space<vmem>>, vector<32x32xf32>
    %cst_39 = arith.constant dense<0.000000e+00> : vector<8x32xf32>
    %104 = tpu.matmul %102, %103, %cst_39 {dimension_numbers = #tpu.dot_dimension_numbers<[1], [0], [0], [1], [0, 0, 1, 1], [], []>} : vector<8x32xf32>, vector<32x32xf32>, vector<8x32xf32> -> vector<8x32xf32>
    %c0_40 = arith.constant 0 : index
    %c0_41 = arith.constant 0 : index
    %105 = vector.load %arg8[%c0_40, %c0_41] : memref<1x32xf32, #tpu.memory_space<vmem>>, vector<1x32xf32>
    %106 = vector.broadcast %105 : vector<1x32xf32> to vector<8x32xf32>
    %107 = arith.addf %104, %106 : vector<8x32xf32>
    %108 = arith.addf %1, %107 : vector<8x32xf32>
    %cst_42 = arith.constant dense<0.000000e+00> : vector<8xf32>
    %109 = vector.multi_reduction <add>, %108, %cst_42 [1] : vector<8x32xf32> to vector<8xf32>
    %110 = vector.shape_cast %109 : vector<8xf32> to vector<8x1xf32>
    %cst_43 = arith.constant 3.200000e+01 : f32
    %111 = vector.broadcast %cst_43 : f32 to vector<8x1xf32>
    %112 = arith.divf %110, %111 : vector<8x1xf32>
    %113 = vector.broadcast %112 : vector<8x1xf32> to vector<8x32xf32>
    %114 = arith.subf %108, %113 : vector<8x32xf32>
    %115 = arith.mulf %114, %114 : vector<8x32xf32>
    %cst_44 = arith.constant dense<0.000000e+00> : vector<8xf32>
    %116 = vector.multi_reduction <add>, %115, %cst_44 [1] : vector<8x32xf32> to vector<8xf32>
    %117 = vector.shape_cast %116 : vector<8xf32> to vector<8x1xf32>
    %cst_45 = arith.constant 3.200000e+01 : f32
    %118 = vector.broadcast %cst_45 : f32 to vector<8x1xf32>
    %119 = arith.divf %117, %118 : vector<8x1xf32>
    %cst_46 = arith.constant 9.99999974E-6 : f32
    %120 = vector.broadcast %cst_46 : f32 to vector<8x1xf32>
    %121 = arith.addf %119, %120 : vector<8x1xf32>
    %122 = math.rsqrt %121 : vector<8x1xf32>
    %123 = vector.broadcast %122 : vector<8x1xf32> to vector<8x32xf32>
    %124 = arith.mulf %114, %123 : vector<8x32xf32>
    %c0_47 = arith.constant 0 : index
    %c0_48 = arith.constant 0 : index
    %125 = vector.load %arg9[%c0_47, %c0_48] : memref<1x32xf32, #tpu.memory_space<vmem>>, vector<1x32xf32>
    %126 = vector.broadcast %125 : vector<1x32xf32> to vector<8x32xf32>
    %127 = arith.mulf %124, %126 : vector<8x32xf32>
    %c0_49 = arith.constant 0 : index
    %c0_50 = arith.constant 0 : index
    %128 = vector.load %arg10[%c0_49, %c0_50] : memref<1x32xf32, #tpu.memory_space<vmem>>, vector<1x32xf32>
    %129 = vector.broadcast %128 : vector<1x32xf32> to vector<8x32xf32>
    %130 = arith.addf %127, %129 : vector<8x32xf32>
    %c0_51 = arith.constant 0 : index
    %c0_52 = arith.constant 0 : index
    %131 = vector.load %arg11[%c0_51, %c0_52] : memref<32x128xf32, #tpu.memory_space<vmem>>, vector<32x128xf32>
    %cst_53 = arith.constant dense<0.000000e+00> : vector<8x128xf32>
    %132 = tpu.matmul %130, %131, %cst_53 {dimension_numbers = #tpu.dot_dimension_numbers<[1], [0], [0], [1], [0, 0, 1, 1], [], []>} : vector<8x32xf32>, vector<32x128xf32>, vector<8x128xf32> -> vector<8x128xf32>
    %c0_54 = arith.constant 0 : index
    %c0_55 = arith.constant 0 : index
    %133 = vector.load %arg12[%c0_54, %c0_55] : memref<1x128xf32, #tpu.memory_space<vmem>>, vector<1x128xf32>
    %134 = vector.broadcast %133 : vector<1x128xf32> to vector<8x128xf32>
    %135 = arith.addf %132, %134 : vector<8x128xf32>
    %cst_56 = arith.constant 1.702000e+00 : f32
    %136 = vector.broadcast %cst_56 : f32 to vector<8x128xf32>
    %137 = arith.mulf %136, %135 : vector<8x128xf32>
    %138 = arith.negf %137 : vector<8x128xf32>
    %139 = math.exp %138 : vector<8x128xf32>
    %cst_57 = arith.constant 1.000000e+00 : f32
    %140 = vector.broadcast %cst_57 : f32 to vector<8x128xf32>
    %141 = arith.addf %140, %139 : vector<8x128xf32>
    %142 = arith.divf %140, %141 : vector<8x128xf32>
    %143 = arith.mulf %135, %142 : vector<8x128xf32>
    %c0_58 = arith.constant 0 : index
    %c0_59 = arith.constant 0 : index
    %144 = vector.load %arg13[%c0_58, %c0_59] : memref<128x32xf32, #tpu.memory_space<vmem>>, vector<128x32xf32>
    %cst_60 = arith.constant dense<0.000000e+00> : vector<8x32xf32>
    %145 = tpu.matmul %143, %144, %cst_60 {dimension_numbers = #tpu.dot_dimension_numbers<[1], [0], [0], [1], [0, 0, 1, 1], [], []>} : vector<8x128xf32>, vector<128x32xf32>, vector<8x32xf32> -> vector<8x32xf32>
    %c0_61 = arith.constant 0 : index
    %c0_62 = arith.constant 0 : index
    %146 = vector.load %arg14[%c0_61, %c0_62] : memref<1x32xf32, #tpu.memory_space<vmem>>, vector<1x32xf32>
    %147 = vector.broadcast %146 : vector<1x32xf32> to vector<8x32xf32>
    %148 = arith.addf %145, %147 : vector<8x32xf32>
    %149 = arith.addf %108, %148 : vector<8x32xf32>
    %c0_63 = arith.constant 0 : index
    %c0_64 = arith.constant 0 : index
    %c0_65 = arith.constant 0 : index
    %150 = vector.load %arg15[%c0_63, %c0_64, %c0_65] : memref<1x8x32xf32, #tpu.memory_space<vmem>>, vector<1x8x32xf32>
    %151 = vector.shape_cast %150 : vector<1x8x32xf32> to vector<8x32xf32>
    %152 = vector.shape_cast %149 : vector<8x32xf32> to vector<1x8x32xf32>
    tpu.vector_store %arg15[%c0_63, %c0_64, %c0_65], %152 {strides = array<i32>} : memref<1x8x32xf32, #tpu.memory_space<vmem>>, vector<1x8x32xf32>,
    return
  }
  func.func @transform_0(%arg0: i32) -> (i32, i32, i32) {
    %c0_i32 = arith.constant 0 : i32
    %c0_i32_0 = arith.constant 0 : i32
    %c0_i32_1 = arith.constant 0 : i32
    return %arg0, %c0_i32, %c0_i32_0 : i32, i32, i32
  }
  func.func @transform_1(%arg0: i32) -> (i32, i32) {
    %c0_i32 = arith.constant 0 : i32
    %c0_i32_0 = arith.constant 0 : i32
    %c0_i32_1 = arith.constant 0 : i32
    return %c0_i32, %c0_i32_0 : i32, i32
  }
  func.func @transform_2(%arg0: i32) -> (i32, i32) {
    %c0_i32 = arith.constant 0 : i32
    %c0_i32_0 = arith.constant 0 : i32
    %c0_i32_1 = arith.constant 0 : i32
    return %c0_i32, %c0_i32_0 : i32, i32
  }
  func.func @transform_3(%arg0: i32) -> (i32, i32) {
    %c0_i32 = arith.constant 0 : i32
    %c0_i32_0 = arith.constant 0 : i32
    %c0_i32_1 = arith.constant 0 : i32
    return %c0_i32, %c0_i32_0 : i32, i32
  }
  func.func @transform_4(%arg0: i32) -> (i32, i32) {
    %c0_i32 = arith.constant 0 : i32
    %c0_i32_0 = arith.constant 0 : i32
    %c0_i32_1 = arith.constant 0 : i32
    return %c0_i32, %c0_i32_0 : i32, i32
  }
  func.func @transform_5(%arg0: i32) -> (i32, i32) {
    %c0_i32 = arith.constant 0 : i32
    %c0_i32_0 = arith.constant 0 : i32
    %c0_i32_1 = arith.constant 0 : i32
    return %c0_i32, %c0_i32_0 : i32, i32
  }
  func.func @transform_6(%arg0: i32) -> (i32, i32) {
    %c0_i32 = arith.constant 0 : i32
    %c0_i32_0 = arith.constant 0 : i32
    %c0_i32_1 = arith.constant 0 : i32
    return %c0_i32, %c0_i32_0 : i32, i32
  }
  func.func @transform_7(%arg0: i32) -> (i32, i32) {
    %c0_i32 = arith.constant 0 : i32
    %c0_i32_0 = arith.constant 0 : i32
    %c0_i32_1 = arith.constant 0 : i32
    return %c0_i32, %c0_i32_0 : i32, i32
  }
  func.func @transform_8(%arg0: i32) -> (i32, i32) {
    %c0_i32 = arith.constant 0 : i32
    %c0_i32_0 = arith.constant 0 : i32
    %c0_i32_1 = arith.constant 0 : i32
    return %c0_i32, %c0_i32_0 : i32, i32
  }
  func.func @transform_9(%arg0: i32) -> (i32, i32) {
    %c0_i32 = arith.constant 0 : i32
    %c0_i32_0 = arith.constant 0 : i32
    %c0_i32_1 = arith.constant 0 : i32
    return %c0_i32, %c0_i32_0 : i32, i32
  }
  func.func @transform_10(%arg0: i32) -> (i32, i32) {
    %c0_i32 = arith.constant 0 : i32
    %c0_i32_0 = arith.constant 0 : i32
    %c0_i32_1 = arith.constant 0 : i32
    return %c0_i32, %c0_i32_0 : i32, i32
  }
  func.func @transform_11(%arg0: i32) -> (i32, i32) {
    %c0_i32 = arith.constant 0 : i32
    %c0_i32_0 = arith.constant 0 : i32
    %c0_i32_1 = arith.constant 0 : i32
    return %c0_i32, %c0_i32_0 : i32, i32
  }
  func.func @transform_12(%arg0: i32) -> (i32, i32) {
    %c0_i32 = arith.constant 0 : i32
    %c0_i32_0 = arith.constant 0 : i32
    %c0_i32_1 = arith.constant 0 : i32
    return %c0_i32, %c0_i32_0 : i32, i32
  }
  func.func @transform_13(%arg0: i32) -> (i32, i32) {
    %c0_i32 = arith.constant 0 : i32
    %c0_i32_0 = arith.constant 0 : i32
    %c0_i32_1 = arith.constant 0 : i32
    return %c0_i32, %c0_i32_0 : i32, i32
  }
  func.func @transform_14(%arg0: i32) -> (i32, i32, i32) {
    %c0_i32 = arith.constant 0 : i32
    %c0_i32_0 = arith.constant 0 : i32
    %c0_i32_1 = arith.constant 0 : i32
    return %arg0, %c0_i32, %c0_i32_0 : i32, i32, i32
  }
}

</mosaic_0001>

<llo_original>
// kernel: transformer_forward.2
$region0: #{transformer_forward.2}
  #allocation0 [shape = 'u32[]', space=smem, size = 0x4, offset = 0x4, fixed_abs, tag = 'smem constant byte address 0x4 - core index']
  #allocation1 [shape = 'u32[144,128]{1,0:T(1,128)}', space=vmem, size = 0x12000, scoped, tag = 'internal scratch']
  %s0 = inlined_call_operand.vmem [shape: f32[2,8,32], index: 0, kind: input, shape index: {}]
  %s1 = inlined_call_operand.vmem [shape: f32[8,8], index: 1, kind: input, shape index: {}]
  %s2 = inlined_call_operand.vmem [shape: f32[1,32], index: 2, kind: input, shape index: {}]
  %s3 = inlined_call_operand.vmem [shape: f32[1,32], index: 3, kind: input, shape index: {}]
  %s4 = inlined_call_operand.vmem [shape: f32[32,96], index: 4, kind: input, shape index: {}]
  %s5 = inlined_call_operand.vmem [shape: f32[1,96], index: 5, kind: input, shape index: {}]
  %s6 = inlined_call_operand.vmem [shape: f32[32,32], index: 6, kind: input, shape index: {}]
  %s7 = inlined_call_operand.vmem [shape: f32[1,32], index: 7, kind: input, shape index: {}]
  %s8 = inlined_call_operand.vmem [shape: f32[1,32], index: 8, kind: input, shape index: {}]
  %s9 = inlined_call_operand.vmem [shape: f32[1,32], index: 9, kind: input, shape index: {}]
  %s10 = inlined_call_operand.vmem [shape: f32[32,128], index: 10, kind: input, shape index: {}]
  %s11 = inlined_call_operand.vmem [shape: f32[1,128], index: 11, kind: input, shape index: {}]
  %s12 = inlined_call_operand.vmem [shape: f32[128,32], index: 12, kind: input, shape index: {}]
  %s13 = inlined_call_operand.vmem [shape: f32[1,32], index: 13, kind: input, shape index: {}]
  %s14 = inlined_call_operand.vmem [shape: f32[2,8,32], index: 14, kind: output, shape index: {}]
  %s15 = sld [smem:[#allocation0]]
  $region89: #{transformer_forward.2} parent=0
    _
  %s17 = ssub.s32 1, %s15
  %s18 = scalar_select 0, %s17, %s15
  loop: start=0, step=1, limit=4
  $region2: #{transformer_forward.2} parent=0 // loop_pre_header
    _
  $region3: #{transformer_forward.2} parent=0 // loop_header
    %s20 = sphi 0, %s24
    %p21 = scmp.ge.s32.totalorder %s20, 4
    %s30 = sphi 0, %s32
    %s33 = sphi 0, %s30
    %s34 = sphi 0, %s33
    %s50 = sphi 0, %s34
    %s54 = sphi 0, %s54
    %s56 = sphi 0, %s54
    %s57 = sphi 0, %s56
    %s71 = sphi 0, %s57
    %s75 = sphi 0, %s75
    %s77 = sphi 0, %s75
    %s78 = sphi 0, %s77
    %s92 = sphi 0, %s78
    %s96 = sphi 0, %s96
    %s98 = sphi 0, %s96
    %s99 = sphi 0, %s98
    %s113 = sphi 0, %s99
    %s117 = sphi 0, %s117
    %s119 = sphi 0, %s117
    %s120 = sphi 0, %s119
    %s134 = sphi 0, %s120
    %s138 = sphi 0, %s138
    %s140 = sphi 0, %s138
    %s141 = sphi 0, %s140
    %s155 = sphi 0, %s141
    %s159 = sphi 0, %s159
    %s161 = sphi 0, %s159
    %s162 = sphi 0, %s161
    %s176 = sphi 0, %s162
    %s180 = sphi 0, %s180
    %s182 = sphi 0, %s180
    %s183 = sphi 0, %s182
    %s197 = sphi 0, %s183
    %s201 = sphi 0, %s201
    %s203 = sphi 0, %s201
    %s204 = sphi 0, %s203
    %s218 = sphi 0, %s204
    %s222 = sphi 0, %s222
    %s224 = sphi 0, %s222
    %s225 = sphi 0, %s224
    %s239 = sphi 0, %s225
    %s243 = sphi 0, %s243
    %s245 = sphi 0, %s243
    %s246 = sphi 0, %s245
    %s260 = sphi 0, %s246
    %s264 = sphi 0, %s264
    %s266 = sphi 0, %s264
    %s267 = sphi 0, %s266
    %s281 = sphi 0, %s267
    %s285 = sphi 0, %s285
    %s287 = sphi 0, %s285
    %s288 = sphi 0, %s287
    %s302 = sphi 0, %s288
    %s306 = sphi 0, %s306
    %s308 = sphi 0, %s306
    %s309 = sphi 0, %s308
    %s323 = sphi 0, %s309
    %s329 = sphi 0, %s331
    %s332 = sphi 0, %s329
    %s333 = sphi 0, %s332
    %s349 = sphi 0, %s333
  $region4: #{transformer_forward.2} parent=0 // loop_header_branch
    %23 = sbr.rel (%p21) target = $region8
  $region5: #{transformer_forward.2} parent=0 // loop_body
    %s25 = ssub.s32 %s20, 1
    %s26 = ssub.s32 %s20, 2
    %s27 = sadd.s32 %s20, 1
    %s28 = ssub.s32 %s20, %s27
    %p29 = scmp.eq.s32.totalorder %s28, 0
    %s31 = sadd.s32 %s30, 1
    %s32 = scalar_select %p29, %s30, %s31
    %p35 = pneg %p29
    %p36 = scmp.eq.s32.totalorder %s20, 1
    %p37 = por %p35, %p36
    %p38 = scmp.ne.s32.totalorder %s30, %s33
    %p39 = scmp.eq.s32.totalorder %s20, 0
    %p40 = por %p38, %p39
    %p41 = scmp.ne.s32.totalorder %s30, %s33
    %p42 = scmp.eq.s32.totalorder %s25, 1
    %p43 = por %p41, %p42
    %p44 = scmp.ne.s32.totalorder %s33, %s34
    %p45 = scmp.eq.s32.totalorder %s25, 0
    %p46 = por %p44, %p45
    %p47 = scmp.ne.s32.totalorder %s33, %s34
    %p48 = scmp.eq.s32.totalorder %s26, 1
    %p49 = por %p47, %p48
    %p51 = scmp.ne.s32.totalorder %s34, %s50
    %p52 = scmp.eq.s32.totalorder %s26, 0
    %p53 = por %p51, %p52
    %s55 = sadd.s32 %s54, 1
    %p58 = scmp.eq.s32.totalorder %s20, 1
    %p59 = scmp.ne.s32.totalorder %s54, %s56
    %p60 = scmp.eq.s32.totalorder %s20, 0
    %p61 = por %p59, %p60
    %p62 = scmp.ne.s32.totalorder %s54, %s56
    %p63 = scmp.eq.s32.totalorder %s25, 1
    %p64 = por %p62, %p63
    %p65 = scmp.ne.s32.totalorder %s56, %s57
    %p66 = scmp.eq.s32.totalorder %s25, 0
    %p67 = por %p65, %p66
    %p68 = scmp.ne.s32.totalorder %s56, %s57
    %p69 = scmp.eq.s32.totalorder %s26, 1
    %p70 = por %p68, %p69
    %p72 = scmp.ne.s32.totalorder %s57, %s71
    %p73 = scmp.eq.s32.totalorder %s26, 0
    %p74 = por %p72, %p73
    %s76 = sadd.s32 %s75, 1
    %p79 = scmp.eq.s32.totalorder %s20, 1
    %p80 = scmp.ne.s32.totalorder %s75, %s77
    %p81 = scmp.eq.s32.totalorder %s20, 0
    %p82 = por %p80, %p81
    %p83 = scmp.ne.s32.totalorder %s75, %s77
    %p84 = scmp.eq.s32.totalorder %s25, 1
    %p85 = por %p83, %p84
    %p86 = scmp.ne.s32.totalorder %s77, %s78
    %p87 = scmp.eq.s32.totalorder %s25, 0
    %p88 = por %p86, %p87
    %p89 = scmp.ne.s32.totalorder %s77, %s78
    %p90 = scmp.eq.s32.totalorder %s26, 1
    %p91 = por %p89, %p90
    %p93 = scmp.ne.s32.totalorder %s78, %s92
    %p94 = scmp.eq.s32.totalorder %s26, 0
    %p95 = por %p93, %p94
    %s97 = sadd.s32 %s96, 1
    %p100 = scmp.eq.s32.totalorder %s20, 1
    %p101 = scmp.ne.s32.totalorder %s96, %s98
    %p102 = scmp.eq.s32.totalorder %s20, 0
    %p103 = por %p101, %p102
    %p104 = scmp.ne.s32.totalorder %s96, %s98
    %p105 = scmp.eq.s32.totalorder %s25, 1
    %p106 = por %p104, %p105
    %p107 = scmp.ne.s32.totalorder %s98, %s99
    %p108 = scmp.eq.s32.totalorder %s25, 0
    %p109 = por %p107, %p108
    %p110 = scmp.ne.s32.totalorder %s98, %s99
    %p111 = scmp.eq.s32.totalorder %s26, 1
    %p112 = por %p110, %p111
    %p114 = scmp.ne.s32.totalorder %s99, %s113
    %p115 = scmp.eq.s32.totalorder %s26, 0
    %p116 = por %p114, %p115
    %s118 = sadd.s32 %s117, 1
    %p121 = scmp.eq.s32.totalorder %s20, 1
    %p122 = scmp.ne.s32.totalorder %s117, %s119
    %p123 = scmp.eq.s32.totalorder %s20, 0
    %p124 = por %p122, %p123
    %p125 = scmp.ne.s32.totalorder %s117, %s119
    %p126 = scmp.eq.s32.totalorder %s25, 1
    %p127 = por %p125, %p126
    %p128 = scmp.ne.s32.totalorder %s119, %s120
    %p129 = scmp.eq.s32.totalorder %s25, 0
    %p130 = por %p128, %p129
    %p131 = scmp.ne.s32.totalorder %s119, %s120
    %p132 = scmp.eq.s32.totalorder %s26, 1
    %p133 = por %p131, %p132
    %p135 = scmp.ne.s32.totalorder %s120, %s134
    %p136 = scmp.eq.s32.totalorder %s26, 0
    %p137 = por %p135, %p136
    %s139 = sadd.s32 %s138, 1
    %p142 = scmp.eq.s32.totalorder %s20, 1
    %p143 = scmp.ne.s32.totalorder %s138, %s140
    %p144 = scmp.eq.s32.totalorder %s20, 0
    %p145 = por %p143, %p144
    %p146 = scmp.ne.s32.totalorder %s138, %s140
    %p147 = scmp.eq.s32.totalorder %s25, 1
    %p148 = por %p146, %p147
    %p149 = scmp.ne.s32.totalorder %s140, %s141
    %p150 = scmp.eq.s32.totalorder %s25, 0
    %p151 = por %p149, %p150
    %p152 = scmp.ne.s32.totalorder %s140, %s141
    %p153 = scmp.eq.s32.totalorder %s26, 1
    %p154 = por %p152, %p153
    %p156 = scmp.ne.s32.totalorder %s141, %s155
    %p157 = scmp.eq.s32.totalorder %s26, 0
    %p158 = por %p156, %p157
    %s160 = sadd.s32 %s159, 1
    %p163 = scmp.eq.s32.totalorder %s20, 1
    %p164 = scmp.ne.s32.totalorder %s159, %s161
    %p165 = scmp.eq.s32.totalorder %s20, 0
    %p166 = por %p164, %p165
    %p167 = scmp.ne.s32.totalorder %s159, %s161
    %p168 = scmp.eq.s32.totalorder %s25, 1
    %p169 = por %p167, %p168
    %p170 = scmp.ne.s32.totalorder %s161, %s162
    %p171 = scmp.eq.s32.totalorder %s25, 0
    %p172 = por %p170, %p171
    %p173 = scmp.ne.s32.totalorder %s161, %s162
    %p174 = scmp.eq.s32.totalorder %s26, 1
    %p175 = por %p173, %p174
    %p177 = scmp.ne.s32.totalorder %s162, %s176
    %p178 = scmp.eq.s32.totalorder %s26, 0
    %p179 = por %p177, %p178
    %s181 = sadd.s32 %s180, 1
    %p184 = scmp.eq.s32.totalorder %s20, 1
    %p185 = scmp.ne.s32.totalorder %s180, %s182
    %p186 = scmp.eq.s32.totalorder %s20, 0
    %p187 = por %p185, %p186
    %p188 = scmp.ne.s32.totalorder %s180, %s182
    %p189 = scmp.eq.s32.totalorder %s25, 1
    %p190 = por %p188, %p189
    %p191 = scmp.ne.s32.totalorder %s182, %s183
    %p192 = scmp.eq.s32.totalorder %s25, 0
    %p193 = por %p191, %p192
    %p194 = scmp.ne.s32.totalorder %s182, %s183
    %p195 = scmp.eq.s32.totalorder %s26, 1
    %p196 = por %p194, %p195
    %p198 = scmp.ne.s32.totalorder %s183, %s197
    %p199 = scmp.eq.s32.totalorder %s26, 0
    %p200 = por %p198, %p199
    %s202 = sadd.s32 %s201, 1
    %p205 = scmp.eq.s32.totalorder %s20, 1
    %p206 = scmp.ne.s32.totalorder %s201, %s203
    %p207 = scmp.eq.s32.totalorder %s20, 0
    %p208 = por %p206, %p207
    %p209 = scmp.ne.s32.totalorder %s201, %s203
    %p210 = scmp.eq.s32.totalorder %s25, 1
    %p211 = por %p209, %p210
    %p212 = scmp.ne.s32.totalorder %s203, %s204
    %p213 = scmp.eq.s32.totalorder %s25, 0
    %p214 = por %p212, %p213
    %p215 = scmp.ne.s32.totalorder %s203, %s204
    %p216 = scmp.eq.s32.totalorder %s26, 1
    %p217 = por %p215, %p216
    %p219 = scmp.ne.s32.totalorder %s204, %s218
    %p220 = scmp.eq.s32.totalorder %s26, 0
    %p221 = por %p219, %p220
    %s223 = sadd.s32 %s222, 1
    %p226 = scmp.eq.s32.totalorder %s20, 1
    %p227 = scmp.ne.s32.totalorder %s222, %s224
    %p228 = scmp.eq.s32.totalorder %s20, 0
    %p229 = por %p227, %p228
    %p230 = scmp.ne.s32.totalorder %s222, %s224
    %p231 = scmp.eq.s32.totalorder %s25, 1
    %p232 = por %p230, %p231
    %p233 = scmp.ne.s32.totalorder %s224, %s225
    %p234 = scmp.eq.s32.totalorder %s25, 0
    %p235 = por %p233, %p234
    %p236 = scmp.ne.s32.totalorder %s224, %s225
    %p237 = scmp.eq.s32.totalorder %s26, 1
    %p238 = por %p236, %p237
    %p240 = scmp.ne.s32.totalorder %s225, %s239
    %p241 = scmp.eq.s32.totalorder %s26, 0
    %p242 = por %p240, %p241
    %s244 = sadd.s32 %s243, 1
    %p247 = scmp.eq.s32.totalorder %s20, 1
    %p248 = scmp.ne.s32.totalorder %s243, %s245
    %p249 = scmp.eq.s32.totalorder %s20, 0
    %p250 = por %p248, %p249
    %p251 = scmp.ne.s32.totalorder %s243, %s245
    %p252 = scmp.eq.s32.totalorder %s25, 1
    %p253 = por %p251, %p252
    %p254 = scmp.ne.s32.totalorder %s245, %s246
    %p255 = scmp.eq.s32.totalorder %s25, 0
    %p256 = por %p254, %p255
    %p257 = scmp.ne.s32.totalorder %s245, %s246
    %p258 = scmp.eq.s32.totalorder %s26, 1
    %p259 = por %p257, %p258
    %p261 = scmp.ne.s32.totalorder %s246, %s260
    %p262 = scmp.eq.s32.totalorder %s26, 0
    %p263 = por %p261, %p262
    %s265 = sadd.s32 %s264, 1
    %p268 = scmp.eq.s32.totalorder %s20, 1
    %p269 = scmp.ne.s32.totalorder %s264, %s266
    %p270 = scmp.eq.s32.totalorder %s20, 0
    %p271 = por %p269, %p270
    %p272 = scmp.ne.s32.totalorder %s264, %s266
    %p273 = scmp.eq.s32.totalorder %s25, 1
    %p274 = por %p272, %p273
    %p275 = scmp.ne.s32.totalorder %s266, %s267
    %p276 = scmp.eq.s32.totalorder %s25, 0
    %p277 = por %p275, %p276
    %p278 = scmp.ne.s32.totalorder %s266, %s267
    %p279 = scmp.eq.s32.totalorder %s26, 1
    %p280 = por %p278, %p279
    %p282 = scmp.ne.s32.totalorder %s267, %s281
    %p283 = scmp.eq.s32.totalorder %s26, 0
    %p284 = por %p282, %p283
    %s286 = sadd.s32 %s285, 1
    %p289 = scmp.eq.s32.totalorder %s20, 1
    %p290 = scmp.ne.s32.totalorder %s285, %s287
    %p291 = scmp.eq.s32.totalorder %s20, 0
    %p292 = por %p290, %p291
    %p293 = scmp.ne.s32.totalorder %s285, %s287
    %p294 = scmp.eq.s32.totalorder %s25, 1
    %p295 = por %p293, %p294
    %p296 = scmp.ne.s32.totalorder %s287, %s288
    %p297 = scmp.eq.s32.totalorder %s25, 0
    %p298 = por %p296, %p297
    %p299 = scmp.ne.s32.totalorder %s287, %s288
    %p300 = scmp.eq.s32.totalorder %s26, 1
    %p301 = por %p299, %p300
    %p303 = scmp.ne.s32.totalorder %s288, %s302
    %p304 = scmp.eq.s32.totalorder %s26, 0
    %p305 = por %p303, %p304
    %s307 = sadd.s32 %s306, 1
    %p310 = scmp.eq.s32.totalorder %s20, 1
    %p311 = scmp.ne.s32.totalorder %s306, %s308
    %p312 = scmp.eq.s32.totalorder %s20, 0
    %p313 = por %p311, %p312
    %p314 = scmp.ne.s32.totalorder %s306, %s308
    %p315 = scmp.eq.s32.totalorder %s25, 1
    %p316 = por %p314, %p315
    %p317 = scmp.ne.s32.totalorder %s308, %s309
    %p318 = scmp.eq.s32.totalorder %s25, 0
    %p319 = por %p317, %p318
    %p320 = scmp.ne.s32.totalorder %s308, %s309
    %p321 = scmp.eq.s32.totalorder %s26, 1
    %p322 = por %p320, %p321
    %p324 = scmp.ne.s32.totalorder %s309, %s323
    %p325 = scmp.eq.s32.totalorder %s26, 0
    %p326 = por %p324, %p325
    %s327 = ssub.s32 %s20, %s27
    %p328 = scmp.eq.s32.totalorder %s327, 0
    %s330 = sadd.s32 %s329, 1
    %s331 = scalar_select %p328, %s329, %s330
    %p334 = pneg %p328
    %p335 = scmp.eq.s32.totalorder %s20, 1
    %p336 = por %p334, %p335
    %p337 = scmp.ne.s32.totalorder %s329, %s332
    %p338 = scmp.eq.s32.totalorder %s20, 0
    %p339 = por %p337, %p338
    %p340 = scmp.ne.s32.totalorder %s329, %s332
    %p341 = scmp.eq.s32.totalorder %s25, 1
    %p342 = por %p340, %p341
    %p343 = scmp.ne.s32.totalorder %s332, %s333
    %p344 = scmp.eq.s32.totalorder %s25, 0
    %p345 = por %p343, %p344
    %p346 = scmp.ne.s32.totalorder %s332, %s333
    %p347 = scmp.eq.s32.totalorder %s26, 1
    %p348 = por %p346, %p347
    %p350 = scmp.ne.s32.totalorder %s333, %s349
    %p351 = scmp.eq.s32.totalorder %s26, 0
    %p352 = por %p350, %p351
    %p353 = scmp.le.s32.totalorder 1, %s20
    %p354 = scmp.lt.s32.totalorder %s20, 3
    %p355 = pnand %p353, %p354
    %p356 = pneg %p355
    // Predicated region
    $region9: #{transformer_forward.2} parent=5 // pred_check
      _
    $region10: #{transformer_forward.2} parent=5 // pred_check_branch
      %358 = sbr.rel (%p355) target = $region12
    $region11: #{transformer_forward.2} parent=5 // pred_region
      %s359 = ssub.s32 %s20, 1
      // Predicated region
      $region13: #{transformer_forward.2} parent=11 // pred_check
        %p360 = pneg %p67
      $region14: #{transformer_forward.2} parent=11 // pred_check_branch
        %362 = sbr.rel (%p360) target = $region16
      $region15: #{transformer_forward.2} parent=11 // pred_region
        _
      $region16: #{transformer_forward.2} parent=11 // pred_fallthru
        _
      // Predicated region
      $region17: #{transformer_forward.2} parent=11 // pred_check
        %p363 = pneg %p88
      $region18: #{transformer_forward.2} parent=11 // pred_check_branch
        %365 = sbr.rel (%p363) target = $region20
      $region19: #{transformer_forward.2} parent=11 // pred_region
        _
      $region20: #{transformer_forward.2} parent=11 // pred_fallthru
        _
      // Predicated region
      $region21: #{transformer_forward.2} parent=11 // pred_check
        %p366 = pneg %p109
      $region22: #{transformer_forward.2} parent=11 // pred_check_branch
        %368 = sbr.rel (%p366) target = $region24
      $region23: #{transformer_forward.2} parent=11 // pred_region
        _
      $region24: #{transformer_forward.2} parent=11 // pred_fallthru
        _
      // Predicated region
      $region25: #{transformer_forward.2} parent=11 // pred_check
        %p369 = pneg %p130
      $region26: #{transformer_forward.2} parent=11 // pred_check_branch
        %371 = sbr.rel (%p369) target = $region28
      $region27: #{transformer_forward.2} parent=11 // pred_region
        _
      $region28: #{transformer_forward.2} parent=11 // pred_fallthru
        _
      // Predicated region
      $region29: #{transformer_forward.2} parent=11 // pred_check
        %p372 = pneg %p151
      $region30: #{transformer_forward.2} parent=11 // pred_check_branch
        %374 = sbr.rel (%p372) target = $region32
      $region31: #{transformer_forward.2} parent=11 // pred_region
        _
      $region32: #{transformer_forward.2} parent=11 // pred_fallthru
        _
      // Predicated region
      $region33: #{transformer_forward.2} parent=11 // pred_check
        %p375 = pneg %p172
      $region34: #{transformer_forward.2} parent=11 // pred_check_branch
        %377 = sbr.rel (%p375) target = $region36
      $region35: #{transformer_forward.2} parent=11 // pred_region
        _
      $region36: #{transformer_forward.2} parent=11 // pred_fallthru
        _
      // Predicated region
      $region37: #{transformer_forward.2} parent=11 // pred_check
        %p378 = pneg %p193
      $region38: #{transformer_forward.2} parent=11 // pred_check_branch
        %380 = sbr.rel (%p378) target = $region40
      $region39: #{transformer_forward.2} parent=11 // pred_region
        _
      $region40: #{transformer_forward.2} parent=11 // pred_fallthru
        _
      // Predicated region
      $region41: #{transformer_forward.2} parent=11 // pred_check
        %p381 = pneg %p214
      $region42: #{transformer_forward.2} parent=11 // pred_check_branch
        %383 = sbr.rel (%p381) target = $region44
      $region43: #{transformer_forward.2} parent=11 // pred_region
        _
      $region44: #{transformer_forward.2} parent=11 // pred_fallthru
        _
      // Predicated region
      $region45: #{transformer_forward.2} parent=11 // pred_check
        %p384 = pneg %p235
      $region46: #{transformer_forward.2} parent=11 // pred_check_branch
        %386 = sbr.rel (%p384) target = $region48
      $region47: #{transformer_forward.2} parent=11 // pred_region
        _
      $region48: #{transformer_forward.2} parent=11 // pred_fallthru
        _
      // Predicated region
      $region49: #{transformer_forward.2} parent=11 // pred_check
        %p387 = pneg %p256
      $region50: #{transformer_forward.2} parent=11 // pred_check_branch
        %389 = sbr.rel (%p387) target = $region52
      $region51: #{transformer_forward.2} parent=11 // pred_region
        _
      $region52: #{transformer_forward.2} parent=11 // pred_fallthru
        _
      // Predicated region
      $region53: #{transformer_forward.2} parent=11 // pred_check
        %p390 = pneg %p277
      $region54: #{transformer_forward.2} parent=11 // pred_check_branch
        %392 = sbr.rel (%p390) target = $region56
      $region55: #{transformer_forward.2} parent=11 // pred_region
        _
      $region56: #{transformer_forward.2} parent=11 // pred_fallthru
        _
      // Predicated region
      $region57: #{transformer_forward.2} parent=11 // pred_check
        %p393 = pneg %p298
      $region58: #{transformer_forward.2} parent=11 // pred_check_branch
        %395 = sbr.rel (%p393) target = $region60
      $region59: #{transformer_forward.2} parent=11 // pred_region
        _
      $region60: #{transformer_forward.2} parent=11 // pred_fallthru
        _
      // Predicated region
      $region61: #{transformer_forward.2} parent=11 // pred_check
        %p396 = pneg %p319
      $region62: #{transformer_forward.2} parent=11 // pred_check_branch
        %398 = sbr.rel (%p396) target = $region64
      $region63: #{transformer_forward.2} parent=11 // pred_region
        _
      $region64: #{transformer_forward.2} parent=11 // pred_fallthru
        _
    $region12: #{transformer_forward.2} parent=5 // pred_fallthru
      _
    %p399 = scmp.lt.s32.totalorder %s20, 2
    // Predicated region
    $region65: #{transformer_forward.2} parent=5 // pred_check
      %p400 = pneg %p399
    $region66: #{transformer_forward.2} parent=5 // pred_check_branch
      %402 = sbr.rel (%p400) target = $region68
    $region67: #{transformer_forward.2} parent=5 // pred_region
      // Predicated region
      $region69: #{transformer_forward.2} parent=67 // pred_check
        %p403 = pneg %p40
      $region70: #{transformer_forward.2} parent=67 // pred_check_branch
        %405 = sbr.rel (%p403) target = $region72
      $region71: #{transformer_forward.2} parent=67 // pred_region
        %p406 = scmp.lt.s32.totalorder %s20, 1
        %s407 = scalar_select %p406, %s20, 1
        %s408 = smul.addr %s407, 8
        %s409 = scalar_lea.vmem %s0, %s408
      $region72: #{transformer_forward.2} parent=67 // pred_fallthru
        _
    $region68: #{transformer_forward.2} parent=5 // pred_fallthru
      _
    %p410 = scmp.le.s32.totalorder 1, %s20
    %p411 = scmp.lt.s32.totalorder %s20, 3
    %p412 = pnand %p410, %p411
    %p413 = pneg %p412
    // Predicated region
    $region73: #{transformer_forward.2} parent=5 // pred_check
      _
    $region74: #{transformer_forward.2} parent=5 // pred_check_branch
      %415 = sbr.rel (%p412) target = $region76
    $region75: #{transformer_forward.2} parent=5 // pred_region
      %s416 = ssub.s32 %s20, 1
      %p417 = scmp.lt.s32.totalorder %s25, 1
      %s418 = scalar_select %p417, %s25, 1
      %s419 = smul.addr %s418, 8
      %s420 = scalar_lea.vmem %s0, %s419
      %p421 = pneg %p46
      %p422 = pneg %p43
      %p423 = pneg %p67
      %p424 = pneg %p64
      %p425 = pneg %p88
      %p426 = pneg %p85
      %p427 = pneg %p109
      %p428 = pneg %p106
      %p429 = pneg %p130
      %p430 = pneg %p127
      %p431 = pneg %p151
      %p432 = pneg %p148
      %p433 = pneg %p172
      %p434 = pneg %p169
      %p435 = pneg %p193
      %p436 = pneg %p190
      %p437 = pneg %p214
      %p438 = pneg %p211
      %p439 = pneg %p235
      %p440 = pneg %p232
      %p441 = pneg %p256
      %p442 = pneg %p253
      %p443 = pneg %p277
      %p444 = pneg %p274
      %p445 = pneg %p298
      %p446 = pneg %p295
      %p447 = pneg %p319
      %p448 = pneg %p316
      %p449 = pneg %p345
      %p450 = pneg %p342
      %p451 = scmp.lt.s32.totalorder %s25, 1
      %s452 = scalar_select %p451, %s25, 1
      %s453 = smul.addr %s452, 8
      %s454 = scalar_lea.vmem %s14, %s453
      %p455 = scmp.lt.s32.totalorder %s25, 1
      %s456 = scalar_select %p455, %s25, 1
      %s457 = smul.addr %s456, 8
      %s458 = scalar_lea.vmem %s0, %s457
      %p459 = scmp.lt.s32.totalorder %s25, 1
      %s460 = scalar_select %p459, %s25, 1
      %s461 = smul.addr %s460, 8
      %s462 = scalar_lea.vmem %s14, %s461
      %v463 = vld [vmem:[%s458] sm:$0xff]
      %vm464 = vcmask 261120
      %v465 = vsel %vm464, %v463, 0.0
      %466 = vadd.xlane.f32.xlu0 %v465
      %v467 = vpop.xlane.xlu0 %466
      %v468 = vrcp.pop 32.0
      %v469 = vmul.f32 %v467, %v468
      %v470 = vsub.f32 %v463, %v469
      %v471 = vmul.f32 %v470, %v470
      %v472 = vsel %vm464, %v471, 0.0
      %473 = vadd.xlane.f32.xlu0 %v472
      %v474 = vpop.xlane.xlu0 %473
      %v475 = vmul.f32 %v474, %v468
      %v476 = vadd.f32 %v475, 1e-05
      %v477 = vrsqrt.pop %v476
      %v478 = vmul.f32 %v470, %v477
      %v479 = vld [vmem:[%s2] sm:$0x1]
      %v481 = vlaneseq
      %v482 = vshrl.u32 %v481, 7
      %v483 = vsub.s32 0, %v482
      %v484 = vrot.slane %v479, %v483
      %v486 = vmul.f32 %v478, %v484
      %v487 = vld [vmem:[%s3] sm:$0x1]
      %v489 = vlaneseq
      %v490 = vshrl.u32 %v489, 7
      %v491 = vsub.s32 0, %v490
      %v492 = vrot.slane %v487, %v491
      %v494 = vadd.f32 %v486, %v492
      %v495 = vld [vmem:[%s1] sm:$0xff]
      %v496 = vld [vmem:[%s4] sm:$0xff]
      %v497 = vld [vmem:[%s4 + $0x8] sm:$0xff]
      %v498 = vld [vmem:[%s4 + $0x10] sm:$0xff]
      %v499 = vld [vmem:[%s4 + $0x18] sm:$0xff]
      %v500 = vld [vmem:[%s5] sm:$0x1]
      %v502 = vlaneseq
      %v503 = vshrl.u32 %v502, 7
      %v504 = vsub.s32 0, %v503
      %v505 = vrot.slane %v500, %v504
      %v508 = vsel %vm464, %v494, 0
      %510 = vmatprep.subr.mxu0 0.0
      %511 = vmatpush1.msra.mxu0 %v496
      %512 = vmatprep.subr.mxu0 0.0
      %513 = vmatpush1.msra.mxu0 %v497
      %514 = vmatprep.subr.mxu0 0.0
      %515 = vmatpush1.msra.mxu0 %v498
      %516 = vmatprep.subr.mxu0 0.0
      %517 = vmatpush1.msra.mxu0 %v499
      %518 = vmatprep.subr.mxu0 0.0
      %519 = vmatpush1.msra.mxu0 0.0
      %520 = vmatprep.subr.mxu0 0.0
      %521 = vmatpush1.msra.mxu0 0.0
      %522 = vmatprep.subr.mxu0 0.0
      %523 = vmatpush1.msra.mxu0 0.0
      %524 = vmatprep.subr.mxu0 0.0
      %525 = vmatpush1.msra.mxu0 0.0
      %526 = vmatprep.subr.mxu0 0.0
      %527 = vmatpush1.msra.mxu0 0.0
      %528 = vmatprep.subr.mxu0 0.0
      %529 = vmatpush1.msra.mxu0 0.0
      %530 = vmatprep.subr.mxu0 0.0
      %531 = vmatpush1.msra.mxu0 0.0
      %532 = vmatprep.subr.mxu0 0.0
      %533 = vmatpush1.msra.mxu0 0.0
      %534 = vmatprep.subr.mxu0 0.0
      %535 = vmatpush1.msra.mxu0 0.0
      %536 = vmatprep.subr.mxu0 0.0
      %537 = vmatpush1.msra.mxu0 0.0
      %538 = vmatprep.subr.mxu0 0.0
      %539 = vmatpush1.msra.mxu0 0.0
      %540 = vmatprep.subr.mxu0 0.0
      %541 = vmatpush1.msra.mxu0 0.0
      %542 = vmatprep.subr.mxu0 0.0
      %543 = vmatpush1.msra.mxu0 0.0
      %544 = vmatprep.subr.mxu0 0.0
      %545 = vmatpush1.msra.mxu0 0.0
      %546 = vmatprep.subr.mxu0 0.0
      %547 = vmatpush1.msra.mxu0 0.0
      %548 = vmatprep.subr.mxu0 0.0
      %549 = vmatpush1.msra.mxu0 0.0
      %550 = vmatprep.subr.mxu0 0.0
      %551 = vmatpush1.msra.mxu0 0.0
      %552 = vmatprep.subr.mxu0 0.0
      %553 = vmatpush1.msra.mxu0 0.0
      %554 = vmatprep.subr.mxu0 0.0
      %555 = vmatpush1.msra.mxu0 0.0
      %556 = vmatprep.subr.mxu0 0.0
      %557 = vmatpush1.msra.mxu0 0.0
      %558 = vmatprep.subr.mxu0 0.0
      %559 = vmatpush1.msra.mxu0 0.0
      %560 = vmatprep.subr.mxu0 0.0
      %561 = vmatpush1.msra.mxu0 0.0
      %562 = vmatprep.subr.mxu0 0.0
      %563 = vmatpush1.msra.mxu0 0.0
      %564 = vmatprep.subr.mxu0 0.0
      %565 = vmatpush1.msra.mxu0 0.0
      %566 = vmatprep.subr.mxu0 0.0
      %567 = vmatpush1.msra.mxu0 0.0
      %568 = vmatprep.subr.mxu0 0.0
      %569 = vmatpush1.msra.mxu0 0.0
      %570 = vmatprep.subr.mxu0 0.0
      %571 = vmatpush1.msra.mxu0 0.0
      %572 = vmatprep.subr.mxu0 0.0
      %573 = vmatpush1.msra.mxu0 0.0
      %574 = vmatprep.mubr.f32.mxu0 0.0
      %575 = vmatmul.mubr.f32.gmra.mrb[0].mxu0 %v508
      %v576 = vpop.f32.mrb[0].mxu0
      %v577 = vadd.f32 %v505, %v576
      %v578 = vpop.f32.mrb[0].mxu0
      %579 = vdwg.mxu0
      %v580 = vmul.f32 %v577, 0.35355338
      %582 = vrot.lane.b32.xlu0 %v577, 96
      %v583 = vpop.permute.xlu0 %582
      %vm584 = vcmask 64512
      %v586 = vsel %vm584, %v580, 0
      %v588 = vsel %vm584, %v583, 0
      %590 = vmatprep.subr.mxu0 0.0
      %591 = vmatpush1.xpose.msra.mxu0 %v588
      %592 = vmatprep.subr.mxu0 0.0
      %593 = vmatpush1.xpose.msra.mxu0 0.0
      %594 = vmatprep.subr.mxu0 0.0
      %595 = vmatpush1.xpose.msra.mxu0 0.0
      %596 = vmatprep.subr.mxu0 0.0
      %597 = vmatpush1.xpose.msra.mxu0 0.0
      %598 = vmatprep.subr.mxu0 0.0
      %599 = vmatpush1.xpose.msra.mxu0 0.0
      %600 = vmatprep.subr.mxu0 0.0
      %601 = vmatpush1.xpose.msra.mxu0 0.0
      %602 = vmatprep.subr.mxu0 0.0
      %603 = vmatpush1.xpose.msra.mxu0 0.0
      %604 = vmatprep.subr.mxu0 0.0
      %605 = vmatpush1.xpose.msra.mxu0 0.0
      %606 = vmatprep.subr.mxu0 0.0
      %607 = vmatpush1.xpose.msra.mxu0 0.0
      %608 = vmatprep.subr.mxu0 0.0
      %609 = vmatpush1.xpose.msra.mxu0 0.0
      %610 = vmatprep.subr.mxu0 0.0
      %611 = vmatpush1.xpose.msra.mxu0 0.0
      %612 = vmatprep.subr.mxu0 0.0
      %613 = vmatpush1.xpose.msra.mxu0 0.0
      %614 = vmatprep.subr.mxu0 0.0
      %615 = vmatpush1.xpose.msra.mxu0 0.0
      %616 = vmatprep.subr.mxu0 0.0
      %617 = vmatpush1.xpose.msra.mxu0 0.0
      %618 = vmatprep.subr.mxu0 0.0
      %619 = vmatpush1.xpose.msra.mxu0 0.0
      %620 = vmatprep.subr.mxu0 0.0
      %621 = vmatpush1.xpose.msra.mxu0 0.0
      %622 = vmatprep.subr.mxu0 0.0
      %623 = vmatpush1.xpose.msra.mxu0 0.0
      %624 = vmatprep.subr.mxu0 0.0
      %625 = vmatpush1.xpose.msra.mxu0 0.0
      %626 = vmatprep.subr.mxu0 0.0
      %627 = vmatpush1.xpose.msra.mxu0 0.0
      %628 = vmatprep.subr.mxu0 0.0
      %629 = vmatpush1.xpose.msra.mxu0 0.0
      %630 = vmatprep.subr.mxu0 0.0
      %631 = vmatpush1.xpose.msra.mxu0 0.0
      %632 = vmatprep.subr.mxu0 0.0
      %633 = vmatpush1.xpose.msra.mxu0 0.0
      %634 = vmatprep.subr.mxu0 0.0
      %635 = vmatpush1.xpose.msra.mxu0 0.0
      %636 = vmatprep.subr.mxu0 0.0
      %637 = vmatpush1.xpose.msra.mxu0 0.0
      %638 = vmatprep.subr.mxu0 0.0
      %639 = vmatpush1.xpose.msra.mxu0 0.0
      %640 = vmatprep.subr.mxu0 0.0
      %641 = vmatpush1.xpose.msra.mxu0 0.0
      %642 = vmatprep.subr.mxu0 0.0
      %643 = vmatpush1.xpose.msra.mxu0 0.0
      %644 = vmatprep.subr.mxu0 0.0
      %645 = vmatpush1.xpose.msra.mxu0 0.0
      %646 = vmatprep.subr.mxu0 0.0
      %647 = vmatpush1.xpose.msra.mxu0 0.0
      %648 = vmatprep.subr.mxu0 0.0
      %649 = vmatpush1.xpose.msra.mxu0 0.0
      %650 = vmatprep.subr.mxu0 0.0
      %651 = vmatpush1.xpose.msra.mxu0 0.0
      %652 = vmatprep.subr.mxu0 0.0
      %653 = vmatpush1.xpose.msra.mxu0 0.0
      %654 = vmatprep.mubr.f32.mxu0 0.0
      %655 = vmatmul.mubr.f32.gmra.mrb[0].mxu0 %v586
      %v656 = vpop.f32.mrb[0].mxu0
      %v657 = vadd.f32 %v495, %v656
      %v658 = vpop.f32.mrb[0].mxu0
      %659 = vdwg.mxu0
      %v660 = vsel %vm584, %v657, -inf
      %661 = vmax.xlane.f32.xlu0 %v660
      %v662 = vpop.xlane.xlu0 %661
      %v663 = vsub.f32 %v657, %v662
      %v664 = vmul.f32 %v663, 1.442695
      %v665 = vpow.pop %v664
      %v666 = vsel %vm584, %v665, 0.0
      %667 = vadd.xlane.f32.xlu0 %v666
      %v668 = vpop.xlane.xlu0 %667
      %v669 = vrcp.pop %v668
      %v670 = vmul.f32 %v665, %v669
      %671 = vrot.lane.b32.xlu0 %v577, 64
      %v672 = vpop.permute.xlu0 %671
      %v675 = vsel %vm584, %v670, 0
      %677 = vmatprep.subr.mxu0 0.0
      %678 = vmatpush1.msra.mxu0 %v672
      %679 = vmatprep.subr.mxu0 0.0
      %680 = vmatpush1.msra.mxu0 0.0
      %681 = vmatprep.subr.mxu0 0.0
      %682 = vmatpush1.msra.mxu0 0.0
      %683 = vmatprep.subr.mxu0 0.0
      %684 = vmatpush1.msra.mxu0 0.0
      %685 = vmatprep.subr.mxu0 0.0
      %686 = vmatpush1.msra.mxu0 0.0
      %687 = vmatprep.subr.mxu0 0.0
      %688 = vmatpush1.msra.mxu0 0.0
      %689 = vmatprep.subr.mxu0 0.0
      %690 = vmatpush1.msra.mxu0 0.0
      %691 = vmatprep.subr.mxu0 0.0
      %692 = vmatpush1.msra.mxu0 0.0
      %693 = vmatprep.subr.mxu0 0.0
      %694 = vmatpush1.msra.mxu0 0.0
      %695 = vmatprep.subr.mxu0 0.0
      %696 = vmatpush1.msra.mxu0 0.0
      %697 = vmatprep.subr.mxu0 0.0
      %698 = vmatpush1.msra.mxu0 0.0
      %699 = vmatprep.subr.mxu0 0.0
      %700 = vmatpush1.msra.mxu0 0.0
      %701 = vmatprep.subr.mxu0 0.0
      %702 = vmatpush1.msra.mxu0 0.0
      %703 = vmatprep.subr.mxu0 0.0
      %704 = vmatpush1.msra.mxu0 0.0
      %705 = vmatprep.subr.mxu0 0.0
      %706 = vmatpush1.msra.mxu0 0.0
      %707 = vmatprep.subr.mxu0 0.0
      %708 = vmatpush1.msra.mxu0 0.0
      %709 = vmatprep.subr.mxu0 0.0
      %710 = vmatpush1.msra.mxu0 0.0
      %711 = vmatprep.subr.mxu0 0.0
      %712 = vmatpush1.msra.mxu0 0.0
      %713 = vmatprep.subr.mxu0 0.0
      %714 = vmatpush1.msra.mxu0 0.0
      %715 = vmatprep.subr.mxu0 0.0
      %716 = vmatpush1.msra.mxu0 0.0
      %717 = vmatprep.subr.mxu0 0.0
      %718 = vmatpush1.msra.mxu0 0.0
      %719 = vmatprep.subr.mxu0 0.0
      %720 = vmatpush1.msra.mxu0 0.0
      %721 = vmatprep.subr.mxu0 0.0
      %722 = vmatpush1.msra.mxu0 0.0
      %723 = vmatprep.subr.mxu0 0.0
      %724 = vmatpush1.msra.mxu0 0.0
      %725 = vmatprep.subr.mxu0 0.0
      %726 = vmatpush1.msra.mxu0 0.0
      %727 = vmatprep.subr.mxu0 0.0
      %728 = vmatpush1.msra.mxu0 0.0
      %729 = vmatprep.subr.mxu0 0.0
      %730 = vmatpush1.msra.mxu0 0.0
      %731 = vmatprep.subr.mxu0 0.0
      %732 = vmatpush1.msra.mxu0 0.0
      %733 = vmatprep.subr.mxu0 0.0
      %734 = vmatpush1.msra.mxu0 0.0
      %735 = vmatprep.subr.mxu0 0.0
      %736 = vmatpush1.msra.mxu0 0.0
      %737 = vmatprep.subr.mxu0 0.0
      %738 = vmatpush1.msra.mxu0 0.0
      %739 = vmatprep.subr.mxu0 0.0
      %740 = vmatpush1.msra.mxu0 0.0
      %741 = vmatprep.mubr.f32.mxu0 0.0
      %742 = vmatmul.mubr.f32.gmra.mrb[0].mxu0 %v675
      %v743 = vpop.f32.mrb[0].mxu0
      %v744 = vadd.f32 0.0, %v743
      %v745 = vpop.f32.mrb[0].mxu0
      %746 = vdwg.mxu0
      %747 = vrot.lane.b32.xlu0 %v580, 120
      %v748 = vpop.permute.xlu0 %747
      %749 = vrot.lane.b32.xlu0 %v577, 88
      %v750 = vpop.permute.xlu0 %749
      %v751 = vsel %vm584, %v748, 0
      %v753 = vsel %vm584, %v750, 0
      %755 = vmatprep.subr.mxu0 0.0
      %756 = vmatpush1.xpose.msra.mxu0 %v753
      %757 = vmatprep.subr.mxu0 0.0
      %758 = vmatpush1.xpose.msra.mxu0 0.0
      %759 = vmatprep.subr.mxu0 0.0
      %760 = vmatpush1.xpose.msra.mxu0 0.0
      %761 = vmatprep.subr.mxu0 0.0
      %762 = vmatpush1.xpose.msra.mxu0 0.0
      %763 = vmatprep.subr.mxu0 0.0
      %764 = vmatpush1.xpose.msra.mxu0 0.0
      %765 = vmatprep.subr.mxu0 0.0
      %766 = vmatpush1.xpose.msra.mxu0 0.0
      %767 = vmatprep.subr.mxu0 0.0
      %768 = vmatpush1.xpose.msra.mxu0 0.0
      %769 = vmatprep.subr.mxu0 0.0
      %770 = vmatpush1.xpose.msra.mxu0 0.0
      %771 = vmatprep.subr.mxu0 0.0
      %772 = vmatpush1.xpose.msra.mxu0 0.0
      %773 = vmatprep.subr.mxu0 0.0
      %774 = vmatpush1.xpose.msra.mxu0 0.0
      %775 = vmatprep.subr.mxu0 0.0
      %776 = vmatpush1.xpose.msra.mxu0 0.0
      %777 = vmatprep.subr.mxu0 0.0
      %778 = vmatpush1.xpose.msra.mxu0 0.0
      %779 = vmatprep.subr.mxu0 0.0
      %780 = vmatpush1.xpose.msra.mxu0 0.0
      %781 = vmatprep.subr.mxu0 0.0
      %782 = vmatpush1.xpose.msra.mxu0 0.0
      %783 = vmatprep.subr.mxu0 0.0
      %784 = vmatpush1.xpose.msra.mxu0 0.0
      %785 = vmatprep.subr.mxu0 0.0
      %786 = vmatpush1.xpose.msra.mxu0 0.0
      %787 = vmatprep.subr.mxu0 0.0
      %788 = vmatpush1.xpose.msra.mxu0 0.0
      %789 = vmatprep.subr.mxu0 0.0
      %790 = vmatpush1.xpose.msra.mxu0 0.0
      %791 = vmatprep.subr.mxu0 0.0
      %792 = vmatpush1.xpose.msra.mxu0 0.0
      %793 = vmatprep.subr.mxu0 0.0
      %794 = vmatpush1.xpose.msra.mxu0 0.0
      %795 = vmatprep.subr.mxu0 0.0
      %796 = vmatpush1.xpose.msra.mxu0 0.0
      %797 = vmatprep.subr.mxu0 0.0
      %798 = vmatpush1.xpose.msra.mxu0 0.0
      %799 = vmatprep.subr.mxu0 0.0
      %800 = vmatpush1.xpose.msra.mxu0 0.0
      %801 = vmatprep.subr.mxu0 0.0
      %802 = vmatpush1.xpose.msra.mxu0 0.0
      %803 = vmatprep.subr.mxu0 0.0
      %804 = vmatpush1.xpose.msra.mxu0 0.0
      %805 = vmatprep.subr.mxu0 0.0
      %806 = vmatpush1.xpose.msra.mxu0 0.0
      %807 = vmatprep.subr.mxu0 0.0
      %808 = vmatpush1.xpose.msra.mxu0 0.0
      %809 = vmatprep.subr.mxu0 0.0
      %810 = vmatpush1.xpose.msra.mxu0 0.0
      %811 = vmatprep.subr.mxu0 0.0
      %812 = vmatpush1.xpose.msra.mxu0 0.0
      %813 = vmatprep.subr.mxu0 0.0
      %814 = vmatpush1.xpose.msra.mxu0 0.0
      %815 = vmatprep.subr.mxu0 0.0
      %816 = vmatpush1.xpose.msra.mxu0 0.0
      %817 = vmatprep.subr.mxu0 0.0
      %818 = vmatpush1.xpose.msra.mxu0 0.0
      %819 = vmatprep.mubr.f32.mxu0 0.0
      %820 = vmatmul.mubr.f32.gmra.mrb[0].mxu0 %v751
      %v821 = vpop.f32.mrb[0].mxu0
      %v822 = vadd.f32 %v495, %v821
      %v823 = vpop.f32.mrb[0].mxu0
      %824 = vdwg.mxu0
      %v825 = vsel %vm584, %v822, -inf
      %826 = vmax.xlane.f32.xlu0 %v825
      %v827 = vpop.xlane.xlu0 %826
      %v828 = vsub.f32 %v822, %v827
      %v829 = vmul.f32 %v828, 1.442695
      %v830 = vpow.pop %v829
      %v831 = vsel %vm584, %v830, 0.0
      %832 = vadd.xlane.f32.xlu0 %v831
      %v833 = vpop.xlane.xlu0 %832
      %v834 = vrcp.pop %v833
      %v835 = vmul.f32 %v830, %v834
      %836 = vrot.lane.b32.xlu0 %v577, 56
      %v837 = vpop.permute.xlu0 %836
      %v840 = vsel %vm584, %v835, 0
      %842 = vmatprep.subr.mxu0 0.0
      %843 = vmatpush1.msra.mxu0 %v837
      %844 = vmatprep.subr.mxu0 0.0
      %845 = vmatpush1.msra.mxu0 0.0
      %846 = vmatprep.subr.mxu0 0.0
      %847 = vmatpush1.msra.mxu0 0.0
      %848 = vmatprep.subr.mxu0 0.0
      %849 = vmatpush1.msra.mxu0 0.0
      %850 = vmatprep.subr.mxu0 0.0
      %851 = vmatpush1.msra.mxu0 0.0
      %852 = vmatprep.subr.mxu0 0.0
      %853 = vmatpush1.msra.mxu0 0.0
      %854 = vmatprep.subr.mxu0 0.0
      %855 = vmatpush1.msra.mxu0 0.0
      %856 = vmatprep.subr.mxu0 0.0
      %857 = vmatpush1.msra.mxu0 0.0
      %858 = vmatprep.subr.mxu0 0.0
      %859 = vmatpush1.msra.mxu0 0.0
      %860 = vmatprep.subr.mxu0 0.0
      %861 = vmatpush1.msra.mxu0 0.0
      %862 = vmatprep.subr.mxu0 0.0
      %863 = vmatpush1.msra.mxu0 0.0
      %864 = vmatprep.subr.mxu0 0.0
      %865 = vmatpush1.msra.mxu0 0.0
      %866 = vmatprep.subr.mxu0 0.0
      %867 = vmatpush1.msra.mxu0 0.0
      %868 = vmatprep.subr.mxu0 0.0
      %869 = vmatpush1.msra.mxu0 0.0
      %870 = vmatprep.subr.mxu0 0.0
      %871 = vmatpush1.msra.mxu0 0.0
      %872 = vmatprep.subr.mxu0 0.0
      %873 = vmatpush1.msra.mxu0 0.0
      %874 = vmatprep.subr.mxu0 0.0
      %875 = vmatpush1.msra.mxu0 0.0
      %876 = vmatprep.subr.mxu0 0.0
      %877 = vmatpush1.msra.mxu0 0.0
      %878 = vmatprep.subr.mxu0 0.0
      %879 = vmatpush1.msra.mxu0 0.0
      %880 = vmatprep.subr.mxu0 0.0
      %881 = vmatpush1.msra.mxu0 0.0
      %882 = vmatprep.subr.mxu0 0.0
      %883 = vmatpush1.msra.mxu0 0.0
      %884 = vmatprep.subr.mxu0 0.0
      %885 = vmatpush1.msra.mxu0 0.0
      %886 = vmatprep.subr.mxu0 0.0
      %887 = vmatpush1.msra.mxu0 0.0
      %888 = vmatprep.subr.mxu0 0.0
      %889 = vmatpush1.msra.mxu0 0.0
      %890 = vmatprep.subr.mxu0 0.0
      %891 = vmatpush1.msra.mxu0 0.0
      %892 = vmatprep.subr.mxu0 0.0
      %893 = vmatpush1.msra.mxu0 0.0
      %894 = vmatprep.subr.mxu0 0.0
      %895 = vmatpush1.msra.mxu0 0.0
      %896 = vmatprep.subr.mxu0 0.0
      %897 = vmatpush1.msra.mxu0 0.0
      %898 = vmatprep.subr.mxu0 0.0
      %899 = vmatpush1.msra.mxu0 0.0
      %900 = vmatprep.subr.mxu0 0.0
      %901 = vmatpush1.msra.mxu0 0.0
      %902 = vmatprep.subr.mxu0 0.0
      %903 = vmatpush1.msra.mxu0 0.0
      %904 = vmatprep.subr.mxu0 0.0
      %905 = vmatpush1.msra.mxu0 0.0
      %906 = vmatprep.mubr.f32.mxu0 0.0
      %907 = vmatmul.mubr.f32.gmra.mrb[0].mxu0 %v840
      %v908 = vpop.f32.mrb[0].mxu0
      %v909 = vadd.f32 0.0, %v908
      %v910 = vpop.f32.mrb[0].mxu0
      %911 = vdwg.mxu0
      %912 = vrot.lane.b32.xlu0 %v580, 112
      %v913 = vpop.permute.xlu0 %912
      %914 = vrot.lane.b32.xlu0 %v577, 80
      %v915 = vpop.permute.xlu0 %914
      %v916 = vsel %vm584, %v913, 0
      %v918 = vsel %vm584, %v915, 0
      %920 = vmatprep.subr.mxu0 0.0
      %921 = vmatpush1.xpose.msra.mxu0 %v918
      %922 = vmatprep.subr.mxu0 0.0
      %923 = vmatpush1.xpose.msra.mxu0 0.0
      %924 = vmatprep.subr.mxu0 0.0
      %925 = vmatpush1.xpose.msra.mxu0 0.0
      %926 = vmatprep.subr.mxu0 0.0
      %927 = vmatpush1.xpose.msra.mxu0 0.0
      %928 = vmatprep.subr.mxu0 0.0
      %929 = vmatpush1.xpose.msra.mxu0 0.0
      %930 = vmatprep.subr.mxu0 0.0
      %931 = vmatpush1.xpose.msra.mxu0 0.0
      %932 = vmatprep.subr.mxu0 0.0
      %933 = vmatpush1.xpose.msra.mxu0 0.0
      %934 = vmatprep.subr.mxu0 0.0
      %935 = vmatpush1.xpose.msra.mxu0 0.0
      %936 = vmatprep.subr.mxu0 0.0
      %937 = vmatpush1.xpose.msra.mxu0 0.0
      %938 = vmatprep.subr.mxu0 0.0
      %939 = vmatpush1.xpose.msra.mxu0 0.0
      %940 = vmatprep.subr.mxu0 0.0
      %941 = vmatpush1.xpose.msra.mxu0 0.0
      %942 = vmatprep.subr.mxu0 0.0
      %943 = vmatpush1.xpose.msra.mxu0 0.0
      %944 = vmatprep.subr.mxu0 0.0
      %945 = vmatpush1.xpose.msra.mxu0 0.0
      %946 = vmatprep.subr.mxu0 0.0
      %947 = vmatpush1.xpose.msra.mxu0 0.0
      %948 = vmatprep.subr.mxu0 0.0
      %949 = vmatpush1.xpose.msra.mxu0 0.0
      %950 = vmatprep.subr.mxu0 0.0
      %951 = vmatpush1.xpose.msra.mxu0 0.0
      %952 = vmatprep.subr.mxu0 0.0
      %953 = vmatpush1.xpose.msra.mxu0 0.0
      %954 = vmatprep.subr.mxu0 0.0
      %955 = vmatpush1.xpose.msra.mxu0 0.0
      %956 = vmatprep.subr.mxu0 0.0
      %957 = vmatpush1.xpose.msra.mxu0 0.0
      %958 = vmatprep.subr.mxu0 0.0
      %959 = vmatpush1.xpose.msra.mxu0 0.0
      %960 = vmatprep.subr.mxu0 0.0
      %961 = vmatpush1.xpose.msra.mxu0 0.0
      %962 = vmatprep.subr.mxu0 0.0
      %963 = vmatpush1.xpose.msra.mxu0 0.0
      %964 = vmatprep.subr.mxu0 0.0
      %965 = vmatpush1.xpose.msra.mxu0 0.0
      %966 = vmatprep.subr.mxu0 0.0
      %967 = vmatpush1.xpose.msra.mxu0 0.0
      %968 = vmatprep.subr.mxu0 0.0
      %969 = vmatpush1.xpose.msra.mxu0 0.0
      %970 = vmatprep.subr.mxu0 0.0
      %971 = vmatpush1.xpose.msra.mxu0 0.0
      %972 = vmatprep.subr.mxu0 0.0
      %973 = vmatpush1.xpose.msra.mxu0 0.0
      %974 = vmatprep.subr.mxu0 0.0
      %975 = vmatpush1.xpose.msra.mxu0 0.0
      %976 = vmatprep.subr.mxu0 0.0
      %977 = vmatpush1.xpose.msra.mxu0 0.0
      %978 = vmatprep.subr.mxu0 0.0
      %979 = vmatpush1.xpose.msra.mxu0 0.0
      %980 = vmatprep.subr.mxu0 0.0
      %981 = vmatpush1.xpose.msra.mxu0 0.0
      %982 = vmatprep.subr.mxu0 0.0
      %983 = vmatpush1.xpose.msra.mxu0 0.0
      %984 = vmatprep.mubr.f32.mxu0 0.0
      %985 = vmatmul.mubr.f32.gmra.mrb[0].mxu0 %v916
      %v986 = vpop.f32.mrb[0].mxu0
      %v987 = vadd.f32 %v495, %v986
      %v988 = vpop.f32.mrb[0].mxu0
      %989 = vdwg.mxu0
      %v990 = vsel %vm584, %v987, -inf
      %991 = vmax.xlane.f32.xlu0 %v990
      %v992 = vpop.xlane.xlu0 %991
      %v993 = vsub.f32 %v987, %v992
      %v994 = vmul.f32 %v993, 1.442695
      %v995 = vpow.pop %v994
      %v996 = vsel %vm584, %v995, 0.0
      %997 = vadd.xlane.f32.xlu0 %v996
      %v998 = vpop.xlane.xlu0 %997
      %v999 = vrcp.pop %v998
      %v1000 = vmul.f32 %v995, %v999
      %1001 = vrot.lane.b32.xlu0 %v577, 48
      %v1002 = vpop.permute.xlu0 %1001
      %v1005 = vsel %vm584, %v1000, 0
      %1007 = vmatprep.subr.mxu0 0.0
      %1008 = vmatpush1.msra.mxu0 %v1002
      %1009 = vmatprep.subr.mxu0 0.0
      %1010 = vmatpush1.msra.mxu0 0.0
      %1011 = vmatprep.subr.mxu0 0.0
      %1012 = vmatpush1.msra.mxu0 0.0
      %1013 = vmatprep.subr.mxu0 0.0
      %1014 = vmatpush1.msra.mxu0 0.0
      %1015 = vmatprep.subr.mxu0 0.0
      %1016 = vmatpush1.msra.mxu0 0.0
      %1017 = vmatprep.subr.mxu0 0.0
      %1018 = vmatpush1.msra.mxu0 0.0
      %1019 = vmatprep.subr.mxu0 0.0
      %1020 = vmatpush1.msra.mxu0 0.0
      %1021 = vmatprep.subr.mxu0 0.0
      %1022 = vmatpush1.msra.mxu0 0.0
      %1023 = vmatprep.subr.mxu0 0.0
      %1024 = vmatpush1.msra.mxu0 0.0
      %1025 = vmatprep.subr.mxu0 0.0
      %1026 = vmatpush1.msra.mxu0 0.0
      %1027 = vmatprep.subr.mxu0 0.0
      %1028 = vmatpush1.msra.mxu0 0.0
      %1029 = vmatprep.subr.mxu0 0.0
      %1030 = vmatpush1.msra.mxu0 0.0
      %1031 = vmatprep.subr.mxu0 0.0
      %1032 = vmatpush1.msra.mxu0 0.0
      %1033 = vmatprep.subr.mxu0 0.0
      %1034 = vmatpush1.msra.mxu0 0.0
      %1035 = vmatprep.subr.mxu0 0.0
      %1036 = vmatpush1.msra.mxu0 0.0
      %1037 = vmatprep.subr.mxu0 0.0
      %1038 = vmatpush1.msra.mxu0 0.0
      %1039 = vmatprep.subr.mxu0 0.0
      %1040 = vmatpush1.msra.mxu0 0.0
      %1041 = vmatprep.subr.mxu0 0.0
      %1042 = vmatpush1.msra.mxu0 0.0
      %1043 = vmatprep.subr.mxu0 0.0
      %1044 = vmatpush1.msra.mxu0 0.0
      %1045 = vmatprep.subr.mxu0 0.0
      %1046 = vmatpush1.msra.mxu0 0.0
      %1047 = vmatprep.subr.mxu0 0.0
      %1048 = vmatpush1.msra.mxu0 0.0
      %1049 = vmatprep.subr.mxu0 0.0
      %1050 = vmatpush1.msra.mxu0 0.0
      %1051 = vmatprep.subr.mxu0 0.0
      %1052 = vmatpush1.msra.mxu0 0.0
      %1053 = vmatprep.subr.mxu0 0.0
      %1054 = vmatpush1.msra.mxu0 0.0
      %1055 = vmatprep.subr.mxu0 0.0
      %1056 = vmatpush1.msra.mxu0 0.0
      %1057 = vmatprep.subr.mxu0 0.0
      %1058 = vmatpush1.msra.mxu0 0.0
      %1059 = vmatprep.subr.mxu0 0.0
      %1060 = vmatpush1.msra.mxu0 0.0
      %1061 = vmatprep.subr.mxu0 0.0
      %1062 = vmatpush1.msra.mxu0 0.0
      %1063 = vmatprep.subr.mxu0 0.0
      %1064 = vmatpush1.msra.mxu0 0.0
      %1065 = vmatprep.subr.mxu0 0.0
      %1066 = vmatpush1.msra.mxu0 0.0
      %1067 = vmatprep.subr.mxu0 0.0
      %1068 = vmatpush1.msra.mxu0 0.0
      %1069 = vmatprep.subr.mxu0 0.0
      %1070 = vmatpush1.msra.mxu0 0.0
      %1071 = vmatprep.mubr.f32.mxu0 0.0
      %1072 = vmatmul.mubr.f32.gmra.mrb[0].mxu0 %v1005
      %v1073 = vpop.f32.mrb[0].mxu0
      %v1074 = vadd.f32 0.0, %v1073
      %v1075 = vpop.f32.mrb[0].mxu0
      %1076 = vdwg.mxu0
      %1077 = vrot.lane.b32.xlu0 %v580, 104
      %v1078 = vpop.permute.xlu0 %1077
      %1079 = vrot.lane.b32.xlu0 %v577, 72
      %v1080 = vpop.permute.xlu0 %1079
      %v1081 = vsel %vm584, %v1078, 0
      %v1083 = vsel %vm584, %v1080, 0
      %1085 = vmatprep.subr.mxu0 0.0
      %1086 = vmatpush1.xpose.msra.mxu0 %v1083
      %1087 = vmatprep.subr.mxu0 0.0
      %1088 = vmatpush1.xpose.msra.mxu0 0.0
      %1089 = vmatprep.subr.mxu0 0.0
      %1090 = vmatpush1.xpose.msra.mxu0 0.0
      %1091 = vmatprep.subr.mxu0 0.0
      %1092 = vmatpush1.xpose.msra.mxu0 0.0
      %1093 = vmatprep.subr.mxu0 0.0
      %1094 = vmatpush1.xpose.msra.mxu0 0.0
      %1095 = vmatprep.subr.mxu0 0.0
      %1096 = vmatpush1.xpose.msra.mxu0 0.0
      %1097 = vmatprep.subr.mxu0 0.0
      %1098 = vmatpush1.xpose.msra.mxu0 0.0
      %1099 = vmatprep.subr.mxu0 0.0
      %1100 = vmatpush1.xpose.msra.mxu0 0.0
      %1101 = vmatprep.subr.mxu0 0.0
      %1102 = vmatpush1.xpose.msra.mxu0 0.0
      %1103 = vmatprep.subr.mxu0 0.0
      %1104 = vmatpush1.xpose.msra.mxu0 0.0
      %1105 = vmatprep.subr.mxu0 0.0
      %1106 = vmatpush1.xpose.msra.mxu0 0.0
      %1107 = vmatprep.subr.mxu0 0.0
      %1108 = vmatpush1.xpose.msra.mxu0 0.0
      %1109 = vmatprep.subr.mxu0 0.0
      %1110 = vmatpush1.xpose.msra.mxu0 0.0
      %1111 = vmatprep.subr.mxu0 0.0
      %1112 = vmatpush1.xpose.msra.mxu0 0.0
      %1113 = vmatprep.subr.mxu0 0.0
      %1114 = vmatpush1.xpose.msra.mxu0 0.0
      %1115 = vmatprep.subr.mxu0 0.0
      %1116 = vmatpush1.xpose.msra.mxu0 0.0
      %1117 = vmatprep.subr.mxu0 0.0
      %1118 = vmatpush1.xpose.msra.mxu0 0.0
      %1119 = vmatprep.subr.mxu0 0.0
      %1120 = vmatpush1.xpose.msra.mxu0 0.0
      %1121 = vmatprep.subr.mxu0 0.0
      %1122 = vmatpush1.xpose.msra.mxu0 0.0
      %1123 = vmatprep.subr.mxu0 0.0
      %1124 = vmatpush1.xpose.msra.mxu0 0.0
      %1125 = vmatprep.subr.mxu0 0.0
      %1126 = vmatpush1.xpose.msra.mxu0 0.0
      %1127 = vmatprep.subr.mxu0 0.0
      %1128 = vmatpush1.xpose.msra.mxu0 0.0
      %1129 = vmatprep.subr.mxu0 0.0
      %1130 = vmatpush1.xpose.msra.mxu0 0.0
      %1131 = vmatprep.subr.mxu0 0.0
      %1132 = vmatpush1.xpose.msra.mxu0 0.0
      %1133 = vmatprep.subr.mxu0 0.0
      %1134 = vmatpush1.xpose.msra.mxu0 0.0
      %1135 = vmatprep.subr.mxu0 0.0
      %1136 = vmatpush1.xpose.msra.mxu0 0.0
      %1137 = vmatprep.subr.mxu0 0.0
      %1138 = vmatpush1.xpose.msra.mxu0 0.0
      %1139 = vmatprep.subr.mxu0 0.0
      %1140 = vmatpush1.xpose.msra.mxu0 0.0
      %1141 = vmatprep.subr.mxu0 0.0
      %1142 = vmatpush1.xpose.msra.mxu0 0.0
      %1143 = vmatprep.subr.mxu0 0.0
      %1144 = vmatpush1.xpose.msra.mxu0 0.0
      %1145 = vmatprep.subr.mxu0 0.0
      %1146 = vmatpush1.xpose.msra.mxu0 0.0
      %1147 = vmatprep.subr.mxu0 0.0
      %1148 = vmatpush1.xpose.msra.mxu0 0.0
      %1149 = vmatprep.mubr.f32.mxu0 0.0
      %1150 = vmatmul.mubr.f32.gmra.mrb[0].mxu0 %v1081
      %v1151 = vpop.f32.mrb[0].mxu0
      %v1152 = vadd.f32 %v495, %v1151
      %v1153 = vpop.f32.mrb[0].mxu0
      %1154 = vdwg.mxu0
      %v1155 = vsel %vm584, %v1152, -inf
      %1156 = vmax.xlane.f32.xlu0 %v1155
      %v1157 = vpop.xlane.xlu0 %1156
      %v1158 = vsub.f32 %v1152, %v1157
      %v1159 = vmul.f32 %v1158, 1.442695
      %v1160 = vpow.pop %v1159
      %v1161 = vsel %vm584, %v1160, 0.0
      %1162 = vadd.xlane.f32.xlu0 %v1161
      %v1163 = vpop.xlane.xlu0 %1162
      %v1164 = vrcp.pop %v1163
      %v1165 = vmul.f32 %v1160, %v1164
      %1166 = vrot.lane.b32.xlu0 %v577, 40
      %v1167 = vpop.permute.xlu0 %1166
      %v1170 = vsel %vm584, %v1165, 0
      %1172 = vmatprep.subr.mxu0 0.0
      %1173 = vmatpush1.msra.mxu0 %v1167
      %1174 = vmatprep.subr.mxu0 0.0
      %1175 = vmatpush1.msra.mxu0 0.0
      %1176 = vmatprep.subr.mxu0 0.0
      %1177 = vmatpush1.msra.mxu0 0.0
      %1178 = vmatprep.subr.mxu0 0.0
      %1179 = vmatpush1.msra.mxu0 0.0
      %1180 = vmatprep.subr.mxu0 0.0
      %1181 = vmatpush1.msra.mxu0 0.0
      %1182 = vmatprep.subr.mxu0 0.0
      %1183 = vmatpush1.msra.mxu0 0.0
      %1184 = vmatprep.subr.mxu0 0.0
      %1185 = vmatpush1.msra.mxu0 0.0
      %1186 = vmatprep.subr.mxu0 0.0
      %1187 = vmatpush1.msra.mxu0 0.0
      %1188 = vmatprep.subr.mxu0 0.0
      %1189 = vmatpush1.msra.mxu0 0.0
      %1190 = vmatprep.subr.mxu0 0.0
      %1191 = vmatpush1.msra.mxu0 0.0
      %1192 = vmatprep.subr.mxu0 0.0
      %1193 = vmatpush1.msra.mxu0 0.0
      %1194 = vmatprep.subr.mxu0 0.0
      %1195 = vmatpush1.msra.mxu0 0.0
      %1196 = vmatprep.subr.mxu0 0.0
      %1197 = vmatpush1.msra.mxu0 0.0
      %1198 = vmatprep.subr.mxu0 0.0
      %1199 = vmatpush1.msra.mxu0 0.0
      %1200 = vmatprep.subr.mxu0 0.0
      %1201 = vmatpush1.msra.mxu0 0.0
      %1202 = vmatprep.subr.mxu0 0.0
      %1203 = vmatpush1.msra.mxu0 0.0
      %1204 = vmatprep.subr.mxu0 0.0
      %1205 = vmatpush1.msra.mxu0 0.0
      %1206 = vmatprep.subr.mxu0 0.0
      %1207 = vmatpush1.msra.mxu0 0.0
      %1208 = vmatprep.subr.mxu0 0.0
      %1209 = vmatpush1.msra.mxu0 0.0
      %1210 = vmatprep.subr.mxu0 0.0
      %1211 = vmatpush1.msra.mxu0 0.0
      %1212 = vmatprep.subr.mxu0 0.0
      %1213 = vmatpush1.msra.mxu0 0.0
      %1214 = vmatprep.subr.mxu0 0.0
      %1215 = vmatpush1.msra.mxu0 0.0
      %1216 = vmatprep.subr.mxu0 0.0
      %1217 = vmatpush1.msra.mxu0 0.0
      %1218 = vmatprep.subr.mxu0 0.0
      %1219 = vmatpush1.msra.mxu0 0.0
      %1220 = vmatprep.subr.mxu0 0.0
      %1221 = vmatpush1.msra.mxu0 0.0
      %1222 = vmatprep.subr.mxu0 0.0
      %1223 = vmatpush1.msra.mxu0 0.0
      %1224 = vmatprep.subr.mxu0 0.0
      %1225 = vmatpush1.msra.mxu0 0.0
      %1226 = vmatprep.subr.mxu0 0.0
      %1227 = vmatpush1.msra.mxu0 0.0
      %1228 = vmatprep.subr.mxu0 0.0
      %1229 = vmatpush1.msra.mxu0 0.0
      %1230 = vmatprep.subr.mxu0 0.0
      %1231 = vmatpush1.msra.mxu0 0.0
      %1232 = vmatprep.subr.mxu0 0.0
      %1233 = vmatpush1.msra.mxu0 0.0
      %1234 = vmatprep.subr.mxu0 0.0
      %1235 = vmatpush1.msra.mxu0 0.0
      %1236 = vmatprep.mubr.f32.mxu0 0.0
      %1237 = vmatmul.mubr.f32.gmra.mrb[0].mxu0 %v1170
      %v1238 = vpop.f32.mrb[0].mxu0
      %v1239 = vadd.f32 0.0, %v1238
      %v1240 = vpop.f32.mrb[0].mxu0
      %1241 = vdwg.mxu0
      %1243 = vrot.lane.b32.xlu0 %v909, 8
      %v1244 = vpop.permute.xlu0 %1243
      %1247 = vrot.lane.b32.xlu0 %v1074, 16
      %v1248 = vpop.permute.xlu0 %1247
      %1251 = vrot.lane.b32.xlu0 %v1239, 24
      %v1252 = vpop.permute.xlu0 %1251
      %v1254 = vsel %vm584, %v744, %v1244
      %vm1255 = vcmask 130048
      %v1256 = vsel %vm1255, %v1254, %v1248
      %vm1257 = vcmask 195584
      %v1258 = vsel %vm1257, %v1256, %v1252
      %v1259 = vld [vmem:[%s6] sm:$0xff]
      %v1260 = vld [vmem:[%s6 + $0x8] sm:$0xff]
      %v1261 = vld [vmem:[%s6 + $0x10] sm:$0xff]
      %v1262 = vld [vmem:[%s6 + $0x18] sm:$0xff]
      %v1263 = vld [vmem:[%s7] sm:$0x1]
      %v1265 = vlaneseq
      %v1266 = vshrl.u32 %v1265, 7
      %v1267 = vsub.s32 0, %v1266
      %v1268 = vrot.slane %v1263, %v1267
      %v1271 = vsel %vm464, %v1258, 0
      %1273 = vmatprep.subr.mxu0 0.0
      %1274 = vmatpush1.msra.mxu0 %v1259
      %1275 = vmatprep.subr.mxu0 0.0
      %1276 = vmatpush1.msra.mxu0 %v1260
      %1277 = vmatprep.subr.mxu0 0.0
      %1278 = vmatpush1.msra.mxu0 %v1261
      %1279 = vmatprep.subr.mxu0 0.0
      %1280 = vmatpush1.msra.mxu0 %v1262
      %1281 = vmatprep.subr.mxu0 0.0
      %1282 = vmatpush1.msra.mxu0 0.0
      %1283 = vmatprep.subr.mxu0 0.0
      %1284 = vmatpush1.msra.mxu0 0.0
      %1285 = vmatprep.subr.mxu0 0.0
      %1286 = vmatpush1.msra.mxu0 0.0
      %1287 = vmatprep.subr.mxu0 0.0
      %1288 = vmatpush1.msra.mxu0 0.0
      %1289 = vmatprep.subr.mxu0 0.0
      %1290 = vmatpush1.msra.mxu0 0.0
      %1291 = vmatprep.subr.mxu0 0.0
      %1292 = vmatpush1.msra.mxu0 0.0
      %1293 = vmatprep.subr.mxu0 0.0
      %1294 = vmatpush1.msra.mxu0 0.0
      %1295 = vmatprep.subr.mxu0 0.0
      %1296 = vmatpush1.msra.mxu0 0.0
      %1297 = vmatprep.subr.mxu0 0.0
      %1298 = vmatpush1.msra.mxu0 0.0
      %1299 = vmatprep.subr.mxu0 0.0
      %1300 = vmatpush1.msra.mxu0 0.0
      %1301 = vmatprep.subr.mxu0 0.0
      %1302 = vmatpush1.msra.mxu0 0.0
      %1303 = vmatprep.subr.mxu0 0.0
      %1304 = vmatpush1.msra.mxu0 0.0
      %1305 = vmatprep.subr.mxu0 0.0
      %1306 = vmatpush1.msra.mxu0 0.0
      %1307 = vmatprep.subr.mxu0 0.0
      %1308 = vmatpush1.msra.mxu0 0.0
      %1309 = vmatprep.subr.mxu0 0.0
      %1310 = vmatpush1.msra.mxu0 0.0
      %1311 = vmatprep.subr.mxu0 0.0
      %1312 = vmatpush1.msra.mxu0 0.0
      %1313 = vmatprep.subr.mxu0 0.0
      %1314 = vmatpush1.msra.mxu0 0.0
      %1315 = vmatprep.subr.mxu0 0.0
      %1316 = vmatpush1.msra.mxu0 0.0
      %1317 = vmatprep.subr.mxu0 0.0
      %1318 = vmatpush1.msra.mxu0 0.0
      %1319 = vmatprep.subr.mxu0 0.0
      %1320 = vmatpush1.msra.mxu0 0.0
      %1321 = vmatprep.subr.mxu0 0.0
      %1322 = vmatpush1.msra.mxu0 0.0
      %1323 = vmatprep.subr.mxu0 0.0
      %1324 = vmatpush1.msra.mxu0 0.0
      %1325 = vmatprep.subr.mxu0 0.0
      %1326 = vmatpush1.msra.mxu0 0.0
      %1327 = vmatprep.subr.mxu0 0.0
      %1328 = vmatpush1.msra.mxu0 0.0
      %1329 = vmatprep.subr.mxu0 0.0
      %1330 = vmatpush1.msra.mxu0 0.0
      %1331 = vmatprep.subr.mxu0 0.0
      %1332 = vmatpush1.msra.mxu0 0.0
      %1333 = vmatprep.subr.mxu0 0.0
      %1334 = vmatpush1.msra.mxu0 0.0
      %1335 = vmatprep.subr.mxu0 0.0
      %1336 = vmatpush1.msra.mxu0 0.0
      %1337 = vmatprep.mubr.f32.mxu0 0.0
      %1338 = vmatmul.mubr.f32.gmra.mrb[0].mxu0 %v1271
      %v1339 = vpop.f32.mrb[0].mxu0
      %v1340 = vadd.f32 %v1268, %v1339
      %v1341 = vpop.f32.mrb[0].mxu0
      %1342 = vdwg.mxu0
      %v1343 = vadd.f32 %v463, %v1340
      %v1344 = vsel %vm464, %v1343, 0.0
      %1345 = vadd.xlane.f32.xlu0 %v1344
      %v1346 = vpop.xlane.xlu0 %1345
      %v1347 = vmul.f32 %v1346, %v468
      %v1348 = vsub.f32 %v1343, %v1347
      %v1349 = vmul.f32 %v1348, %v1348
      %v1350 = vsel %vm464, %v1349, 0.0
      %1351 = vadd.xlane.f32.xlu0 %v1350
      %v1352 = vpop.xlane.xlu0 %1351
      %v1353 = vmul.f32 %v1352, %v468
      %v1354 = vadd.f32 %v1353, 1e-05
      %v1355 = vrsqrt.pop %v1354
      %v1356 = vmul.f32 %v1348, %v1355
      %v1357 = vld [vmem:[%s8] sm:$0x1]
      %v1359 = vlaneseq
      %v1360 = vshrl.u32 %v1359, 7
      %v1361 = vsub.s32 0, %v1360
      %v1362 = vrot.slane %v1357, %v1361
      %v1364 = vmul.f32 %v1356, %v1362
      %v1365 = vld [vmem:[%s9] sm:$0x1]
      %v1367 = vlaneseq
      %v1368 = vshrl.u32 %v1367, 7
      %v1369 = vsub.s32 0, %v1368
      %v1370 = vrot.slane %v1365, %v1369
      %v1372 = vadd.f32 %v1364, %v1370
      %v1373 = vld [vmem:[%s10] sm:$0xff]
      %v1374 = vld [vmem:[%s10 + $0x8] sm:$0xff]
      %v1375 = vld [vmem:[%s10 + $0x10] sm:$0xff]
      %v1376 = vld [vmem:[%s10 + $0x18] sm:$0xff]
      %v1377 = vld [vmem:[%s11] sm:$0x1]
      %v1379 = vlaneseq
      %v1380 = vshrl.u32 %v1379, 7
      %v1381 = vsub.s32 0, %v1380
      %v1382 = vrot.slane %v1377, %v1381
      %v1385 = vsel %vm464, %v1372, 0
      %1387 = vmatprep.subr.mxu0 0.0
      %1388 = vmatpush1.msra.mxu0 %v1373
      %1389 = vmatprep.subr.mxu0 0.0
      %1390 = vmatpush1.msra.mxu0 %v1374
      %1391 = vmatprep.subr.mxu0 0.0
      %1392 = vmatpush1.msra.mxu0 %v1375
      %1393 = vmatprep.subr.mxu0 0.0
      %1394 = vmatpush1.msra.mxu0 %v1376
      %1395 = vmatprep.subr.mxu0 0.0
      %1396 = vmatpush1.msra.mxu0 0.0
      %1397 = vmatprep.subr.mxu0 0.0
      %1398 = vmatpush1.msra.mxu0 0.0
      %1399 = vmatprep.subr.mxu0 0.0
      %1400 = vmatpush1.msra.mxu0 0.0
      %1401 = vmatprep.subr.mxu0 0.0
      %1402 = vmatpush1.msra.mxu0 0.0
      %1403 = vmatprep.subr.mxu0 0.0
      %1404 = vmatpush1.msra.mxu0 0.0
      %1405 = vmatprep.subr.mxu0 0.0
      %1406 = vmatpush1.msra.mxu0 0.0
      %1407 = vmatprep.subr.mxu0 0.0
      %1408 = vmatpush1.msra.mxu0 0.0
      %1409 = vmatprep.subr.mxu0 0.0
      %1410 = vmatpush1.msra.mxu0 0.0
      %1411 = vmatprep.subr.mxu0 0.0
      %1412 = vmatpush1.msra.mxu0 0.0
      %1413 = vmatprep.subr.mxu0 0.0
      %1414 = vmatpush1.msra.mxu0 0.0
      %1415 = vmatprep.subr.mxu0 0.0
      %1416 = vmatpush1.msra.mxu0 0.0
      %1417 = vmatprep.subr.mxu0 0.0
      %1418 = vmatpush1.msra.mxu0 0.0
      %1419 = vmatprep.subr.mxu0 0.0
      %1420 = vmatpush1.msra.mxu0 0.0
      %1421 = vmatprep.subr.mxu0 0.0
      %1422 = vmatpush1.msra.mxu0 0.0
      %1423 = vmatprep.subr.mxu0 0.0
      %1424 = vmatpush1.msra.mxu0 0.0
      %1425 = vmatprep.subr.mxu0 0.0
      %1426 = vmatpush1.msra.mxu0 0.0
      %1427 = vmatprep.subr.mxu0 0.0
      %1428 = vmatpush1.msra.mxu0 0.0
      %1429 = vmatprep.subr.mxu0 0.0
      %1430 = vmatpush1.msra.mxu0 0.0
      %1431 = vmatprep.subr.mxu0 0.0
      %1432 = vmatpush1.msra.mxu0 0.0
      %1433 = vmatprep.subr.mxu0 0.0
      %1434 = vmatpush1.msra.mxu0 0.0
      %1435 = vmatprep.subr.mxu0 0.0
      %1436 = vmatpush1.msra.mxu0 0.0
      %1437 = vmatprep.subr.mxu0 0.0
      %1438 = vmatpush1.msra.mxu0 0.0
      %1439 = vmatprep.subr.mxu0 0.0
      %1440 = vmatpush1.msra.mxu0 0.0
      %1441 = vmatprep.subr.mxu0 0.0
      %1442 = vmatpush1.msra.mxu0 0.0
      %1443 = vmatprep.subr.mxu0 0.0
      %1444 = vmatpush1.msra.mxu0 0.0
      %1445 = vmatprep.subr.mxu0 0.0
      %1446 = vmatpush1.msra.mxu0 0.0
      %1447 = vmatprep.subr.mxu0 0.0
      %1448 = vmatpush1.msra.mxu0 0.0
      %1449 = vmatprep.subr.mxu0 0.0
      %1450 = vmatpush1.msra.mxu0 0.0
      %1451 = vmatprep.mubr.f32.mxu0 0.0
      %1452 = vmatmul.mubr.f32.gmra.mrb[0].mxu0 %v1385
      %v1453 = vpop.f32.mrb[0].mxu0
      %v1454 = vadd.f32 %v1382, %v1453
      %v1455 = vpop.f32.mrb[0].mxu0
      %1456 = vdwg.mxu0
      %v1457 = vmul.f32 %v1454, 1.702
      %v1458 = vxor.u32 %v1457, 2147483648
      %v1459 = vmul.f32 %v1458, 1.442695
      %v1460 = vpow.pop %v1459
      %v1461 = vadd.f32 %v1460, 1.0
      %v1462 = vrcp.pop %v1461
      %v1463 = vmul.f32 1.0, %v1462
      %v1464 = vmul.f32 %v1454, %v1463
      %v1465 = vld [vmem:[%s12] sm:$0xff]
      %v1466 = vld [vmem:[%s12 + $0x8] sm:$0xff]
      %v1467 = vld [vmem:[%s12 + $0x10] sm:$0xff]
      %v1468 = vld [vmem:[%s12 + $0x18] sm:$0xff]
      %v1469 = vld [vmem:[%s12 + $0x20] sm:$0xff]
      %v1470 = vld [vmem:[%s12 + $0x28] sm:$0xff]
      %v1471 = vld [vmem:[%s12 + $0x30] sm:$0xff]
      %v1472 = vld [vmem:[%s12 + $0x38] sm:$0xff]
      %v1473 = vld [vmem:[%s12 + $0x40] sm:$0xff]
      %v1474 = vld [vmem:[%s12 + $0x48] sm:$0xff]
      %v1475 = vld [vmem:[%s12 + $0x50] sm:$0xff]
      %v1476 = vld [vmem:[%s12 + $0x58] sm:$0xff]
      %v1477 = vld [vmem:[%s12 + $0x60] sm:$0xff]
      %v1478 = vld [vmem:[%s12 + $0x68] sm:$0xff]
      %v1479 = vld [vmem:[%s12 + $0x70] sm:$0xff]
      %v1480 = vld [vmem:[%s12 + $0x78] sm:$0xff]
      %v1481 = vld [vmem:[%s13] sm:$0x1]
      %v1483 = vlaneseq
      %v1484 = vshrl.u32 %v1483, 7
      %v1485 = vsub.s32 0, %v1484
      %v1486 = vrot.slane %v1481, %v1485
      %1488 = vmatprep.subr.mxu0 0.0
      %1489 = vmatpush1.msra.mxu0 %v1465
      %1490 = vmatprep.subr.mxu0 0.0
      %1491 = vmatpush1.msra.mxu0 %v1466
      %1492 = vmatprep.subr.mxu0 0.0
      %1493 = vmatpush1.msra.mxu0 %v1467
      %1494 = vmatprep.subr.mxu0 0.0
      %1495 = vmatpush1.msra.mxu0 %v1468
      %1496 = vmatprep.subr.mxu0 0.0
      %1497 = vmatpush1.msra.mxu0 %v1469
      %1498 = vmatprep.subr.mxu0 0.0
      %1499 = vmatpush1.msra.mxu0 %v1470
      %1500 = vmatprep.subr.mxu0 0.0
      %1501 = vmatpush1.msra.mxu0 %v1471
      %1502 = vmatprep.subr.mxu0 0.0
      %1503 = vmatpush1.msra.mxu0 %v1472
      %1504 = vmatprep.subr.mxu0 0.0
      %1505 = vmatpush1.msra.mxu0 %v1473
      %1506 = vmatprep.subr.mxu0 0.0
      %1507 = vmatpush1.msra.mxu0 %v1474
      %1508 = vmatprep.subr.mxu0 0.0
      %1509 = vmatpush1.msra.mxu0 %v1475
      %1510 = vmatprep.subr.mxu0 0.0
      %1511 = vmatpush1.msra.mxu0 %v1476
      %1512 = vmatprep.subr.mxu0 0.0
      %1513 = vmatpush1.msra.mxu0 %v1477
      %1514 = vmatprep.subr.mxu0 0.0
      %1515 = vmatpush1.msra.mxu0 %v1478
      %1516 = vmatprep.subr.mxu0 0.0
      %1517 = vmatpush1.msra.mxu0 %v1479
      %1518 = vmatprep.subr.mxu0 0.0
      %1519 = vmatpush1.msra.mxu0 %v1480
      %1520 = vmatprep.subr.mxu0 0.0
      %1521 = vmatpush1.msra.mxu0 0.0
      %1522 = vmatprep.subr.mxu0 0.0
      %1523 = vmatpush1.msra.mxu0 0.0
      %1524 = vmatprep.subr.mxu0 0.0
      %1525 = vmatpush1.msra.mxu0 0.0
      %1526 = vmatprep.subr.mxu0 0.0
      %1527 = vmatpush1.msra.mxu0 0.0
      %1528 = vmatprep.subr.mxu0 0.0
      %1529 = vmatpush1.msra.mxu0 0.0
      %1530 = vmatprep.subr.mxu0 0.0
      %1531 = vmatpush1.msra.mxu0 0.0
      %1532 = vmatprep.subr.mxu0 0.0
      %1533 = vmatpush1.msra.mxu0 0.0
      %1534 = vmatprep.subr.mxu0 0.0
      %1535 = vmatpush1.msra.mxu0 0.0
      %1536 = vmatprep.subr.mxu0 0.0
      %1537 = vmatpush1.msra.mxu0 0.0
      %1538 = vmatprep.subr.mxu0 0.0
      %1539 = vmatpush1.msra.mxu0 0.0
      %1540 = vmatprep.subr.mxu0 0.0
      %1541 = vmatpush1.msra.mxu0 0.0
      %1542 = vmatprep.subr.mxu0 0.0
      %1543 = vmatpush1.msra.mxu0 0.0
      %1544 = vmatprep.subr.mxu0 0.0
      %1545 = vmatpush1.msra.mxu0 0.0
      %1546 = vmatprep.subr.mxu0 0.0
      %1547 = vmatpush1.msra.mxu0 0.0
      %1548 = vmatprep.subr.mxu0 0.0
      %1549 = vmatpush1.msra.mxu0 0.0
      %1550 = vmatprep.subr.mxu0 0.0
      %1551 = vmatpush1.msra.mxu0 0.0
      %1552 = vmatprep.mubr.f32.mxu0 0.0
      %1553 = vmatmul.mubr.f32.gmra.mrb[0].mxu0 %v1464
      %v1554 = vpop.f32.mrb[0].mxu0
      %v1555 = vadd.f32 %v1486, %v1554
      %v1556 = vpop.f32.mrb[0].mxu0
      %1557 = vdwg.mxu0
      %v1558 = vadd.f32 %v1343, %v1555
      %1559 = vst.msk [vmem:[%s462] sm:$0xff] %vm464, %v1558
      %p1560 = scmp.lt.s32.totalorder %s25, 1
      %s1561 = scalar_select %p1560, %s25, 1
      %s1562 = smul.addr %s1561, 8
      %s1563 = scalar_lea.vmem %s14, %s1562
      // Predicated region
      $region77: #{transformer_forward.2} parent=75 // pred_check
        %p1564 = pneg %p342
      $region78: #{transformer_forward.2} parent=75 // pred_check_branch
        %1566 = sbr.rel (%p1564) target = $region80
      $region79: #{transformer_forward.2} parent=75 // pred_region
        _
      $region80: #{transformer_forward.2} parent=75 // pred_fallthru
        _
    $region76: #{transformer_forward.2} parent=5 // pred_fallthru
      _
    %p1567 = scmp.le.s32.totalorder 2, %s20
    // Predicated region
    $region81: #{transformer_forward.2} parent=5 // pred_check
      %p1568 = pneg %p1567
    $region82: #{transformer_forward.2} parent=5 // pred_check_branch
      %1570 = sbr.rel (%p1568) target = $region84
    $region83: #{transformer_forward.2} parent=5 // pred_region
      %s1571 = ssub.s32 %s20, 2
      // Predicated region
      $region85: #{transformer_forward.2} parent=83 // pred_check
        %p1572 = pneg %p348
      $region86: #{transformer_forward.2} parent=83 // pred_check_branch
        %1574 = sbr.rel (%p1572) target = $region88
      $region87: #{transformer_forward.2} parent=83 // pred_region
        %p1575 = scmp.lt.s32.totalorder %s26, 1
        %s1576 = scalar_select %p1575, %s26, 1
        %s1577 = smul.addr %s1576, 8
        %s1578 = scalar_lea.vmem %s14, %s1577
      $region88: #{transformer_forward.2} parent=83 // pred_fallthru
        _
    $region84: #{transformer_forward.2} parent=5 // pred_fallthru
      _
  $region6: #{transformer_forward.2} parent=0 // loop_footer
    %s24 = sadd.s32 1, %s20
  $region7: #{transformer_forward.2} parent=0 // loop_footer_branch
    %19 = sbr.rel target = $region3
  $region8: #{transformer_forward.2} parent=0 // loop_exit
    _

</llo_original>
